<compile_context>
chip_gen: v7x
topology: tpu7x:2x2x1
jax: 0.10.0
libtpu: 0.0.40
codegen_flags: <defaults>
</compile_context>

<pallas_src>
import jax
import jax.numpy as jnp
from jax.experimental import pallas as pl
from jax.experimental.pallas import tpu as pltpu

# ---- problem sizes (small, consistent with the module: gate is Linear(64,64)) ----
N_USERS     = 16
N_ITEMS     = 24
N_ENTITIES  = 48          # items first, then attribute entities
N_RELATIONS = 8
N_EDGES     = 64
NNZ         = 64          # non-zeros of the sparse interact_mat
CH          = 64          # embedding channel (fixed by gate1/gate2 = Linear(64,64))

N_TABLE   = N_ENTITIES + N_USERS      # 64  : stacked gather table rows
N_GATHER  = N_EDGES + NNZ             # 128 : fused gather/scatter source rows
N_SCATTER = N_ENTITIES + N_ITEMS      # 72  : fused scatter destination rows

_NN = (((1,), (0,)), ((), ()))   # standard matmul
_NT = (((1,), (1,)), ((), ()))   # rhs transposed (contract last dims)


# --------------------------- Pallas kernel ----------------------------------
def aggregator_kernel(ent_ref, usr_ref, w_ref, g1_ref, g2_ref,
                      gidx_ref, ridx_ref, sidx_ref, cidx_ref, rowidx_ref,
                      out_ref):
    f32 = jnp.float32

    def dot_nn(a, b):
        return jax.lax.dot_general(a, b, _NN, preferred_element_type=f32)

    def dot_nt(a, b):
        return jax.lax.dot_general(a, b, _NT, preferred_element_type=f32)

    # ---- fused gather: rows 0..63 = entity_emb[tail], rows 64..127 = user_emb[mat_row]
    table = jnp.concatenate([ent_ref[...], usr_ref[...]], axis=0)         # [64, CH]
    gidx = gidx_ref[...]                                                  # [128, 1] int32
    g_mask = jnp.where(
        gidx == jax.lax.broadcasted_iota(jnp.int32, (N_GATHER, N_TABLE), 1),
        1.0, 0.0)                                                         # [128, 64]
    gathered = dot_nn(g_mask, table)                                      # [128, CH]

    # ---- relation multiplier (exact VPU selects); CF rows have ridx==0 -> weight[0]
    w = w_ref[...]                                                        # [N_REL, CH]
    ridx = ridx_ref[...]                                                  # [128, 1] int32
    rel = jnp.zeros((N_GATHER, CH), f32)
    for r in range(N_RELATIONS):
        rel = jnp.where(ridx == r, w[r:r + 1, :], rel)
    neigh = gathered * rel                                                # [128, CH]

    # ---- fused scatter-mean: rows 0..47 entity_agg (by head),
    #                          rows 48..71 i_u_agg   (by mat_col + N_ENTITIES)
    sidx = sidx_ref[...]                                                  # [1, 128] int32
    s_mask = jnp.where(
        sidx == jax.lax.broadcasted_iota(jnp.int32, (N_SCATTER, N_GATHER), 0),
        1.0, 0.0)                                                         # [72, 128]
    cnt = jnp.maximum(jnp.sum(s_mask, axis=1, keepdims=True), 1.0)        # [72, 1]
    agg = dot_nn(s_mask, neigh) / cnt                                     # [72, CH]

    item_kg = agg[:N_ITEMS, :]                                            # [24, CH]
    att_kg  = agg[N_ITEMS:N_ENTITIES, :]                                  # [24, CH]
    i_u     = agg[N_ENTITIES:, :]                                         # [24, CH]

    # ---- fused gate: sigmoid([kg | cf] @ [W1 | W2]^T), single K=128 MXU op
    x_cat = jnp.concatenate([item_kg, i_u], axis=1)                       # [24, 2*CH]
    w_cat = jnp.concatenate([g1_ref[...], g2_ref[...]], axis=1)           # [CH, 2*CH]
    gi = jax.nn.sigmoid(dot_nt(x_cat, w_cat))                             # [24, CH]
    fusion = gi * item_kg + (1.0 - gi) * i_u                              # [24, CH]

    # ---- user aggregation: sparse.mm(user_item ones matrix, item_emb_fusion)
    cidx = cidx_ref[...]                                                  # [64, 1] int32
    c_mask = jnp.where(
        cidx == jax.lax.broadcasted_iota(jnp.int32, (NNZ, N_ITEMS), 1),
        1.0, 0.0)                                                         # [64, 24]
    rowidx = rowidx_ref[...]                                              # [1, 64] int32
    r_mask = jnp.where(
        rowidx == jax.lax.broadcasted_iota(jnp.int32, (N_USERS, NNZ), 0),
        1.0, 0.0)                                                         # [16, 64]
    a_mat = dot_nn(r_mask, c_mask)                                        # [16, 24] (dups summed)
    user_agg = dot_nn(a_mat, fusion)                                      # [16, CH]

    # ---- single combined output: fusion | attribute entities | users
    out_ref[...] = jnp.concatenate([fusion, att_kg, user_agg], axis=0)    # [64, CH]


# ------------------------------ glue / wrapper -------------------------------
@jax.jit
def aggregator_forward(entity_emb, user_emb, edge_index, edge_type,
                       mat_row, mat_col, weight, gate1_w, gate2_w):
    """Returns (entity_agg, user_agg) with the same semantics as Aggregator.forward
    (use_gate=True, fast_weights=None)."""
    head, tail = edge_index[0], edge_index[1]
    i32 = jnp.int32

    # fused gather indices: entity rows first, then user rows offset by N_ENTITIES
    g_idx = jnp.concatenate(
        [tail.astype(i32), mat_row.astype(i32) + N_ENTITIES]).reshape(N_GATHER, 1)
    # relation indices: edge_type for KG rows, 0 (-> weight[0]) for CF rows
    r_idx = jnp.concatenate(
        [edge_type.astype(i32), jnp.zeros((NNZ,), i32)]).reshape(N_GATHER, 1)
    # fused scatter indices: head for KG rows, mat_col + N_ENTITIES for CF rows
    s_idx = jnp.concatenate(
        [head.astype(i32), mat_col.astype(i32) + N_ENTITIES]).reshape(1, N_GATHER)
    c_idx   = mat_col.reshape(NNZ, 1).astype(i32)
    row_idx = mat_row.reshape(1, NNZ).astype(i32)

    vmem = pl.BlockSpec(memory_space=pltpu.MemorySpace.VMEM)
    out = pl.pallas_call(
        aggregator_kernel,
        out_shape=jax.ShapeDtypeStruct((N_ENTITIES + N_USERS, CH), jnp.float32),
        in_specs=[vmem] * 10,
        out_specs=vmem,
    )(entity_emb, user_emb, weight, gate1_w, gate2_w,
      g_idx, r_idx, s_idx, c_idx, row_idx)

    entity_out = out[:N_ENTITIES]
    user_agg = out[N_ENTITIES:]
    return entity_out, user_agg


# ------------------------------ pure-JAX reference ---------------------------
def _segment_mean(src, idx, num):
    sums = jnp.zeros((num, src.shape[1]), src.dtype).at[idx].add(src)
    cnt = jnp.zeros((num,), src.dtype).at[idx].add(1.0)
    return sums / jnp.maximum(cnt, 1.0)[:, None]


def reference_forward(entity_emb, user_emb, edge_index, edge_type,
                      mat_row, mat_col, weight, gate1_w, gate2_w):
    head, tail = edge_index[0], edge_index[1]
    neigh = entity_emb[tail] * weight[edge_type]
    entity_agg = _segment_mean(neigh, head, N_ENTITIES)
    item_kg_agg = entity_agg[:N_ITEMS]
    att_kg_agg = entity_agg[N_ITEMS:]
    item_neigh = user_emb[mat_row] * weight[0]
    i_u_agg = _segment_mean(item_neigh, mat_col, N_ITEMS)
    gi = jax.nn.sigmoid(item_kg_agg @ gate1_w.T + i_u_agg @ gate2_w.T)
    fusion = gi * item_kg_agg + (1.0 - gi) * i_u_agg
    a_mat = jnp.zeros((N_USERS, N_ITEMS), jnp.float32).at[mat_row, mat_col].add(1.0)
    user_agg = a_mat @ fusion
    entity_out = jnp.concatenate([fusion, att_kg_agg], axis=0)
    return entity_out, user_agg


# ----------------------------------- main ------------------------------------
if __name__ == "__main__":
    key = jax.random.PRNGKey(0)
    ks = jax.random.split(key, 8)

    entity_emb = jax.random.normal(ks[0], (N_ENTITIES, CH), jnp.float32) * 0.1
    user_emb   = jax.random.normal(ks[1], (N_USERS, CH), jnp.float32) * 0.1
    weight     = jax.random.normal(ks[2], (N_RELATIONS, CH), jnp.float32) * 0.1
    gate1_w    = jax.random.normal(ks[3], (CH, CH), jnp.float32) / jnp.sqrt(CH)
    gate2_w    = jax.random.normal(ks[4], (CH, CH), jnp.float32) / jnp.sqrt(CH)

    edge_index = jax.random.randint(ks[5], (2, N_EDGES), 0, N_ENTITIES, jnp.int32)
    edge_type  = jax.random.randint(ks[6], (N_EDGES,), 0, N_RELATIONS, jnp.int32)
    rc         = jax.random.randint(ks[7], (2, NNZ), 0, 10**6, jnp.int32)
    mat_row    = rc[0] % N_USERS
    mat_col    = rc[1] % N_ITEMS

    ent_agg, usr_agg = aggregator_forward(entity_emb, user_emb, edge_index, edge_type,
                                          mat_row, mat_col, weight, gate1_w, gate2_w)
    jax.block_until_ready((ent_agg, usr_agg))

    ent_ref, usr_ref = reference_forward(entity_emb, user_emb, edge_index, edge_type,
                                         mat_row, mat_col, weight, gate1_w, gate2_w)
    assert jnp.allclose(ent_agg, ent_ref, atol=5e-2, rtol=5e-2), "entity_agg mismatch"
    assert jnp.allclose(usr_agg, usr_ref, atol=5e-2, rtol=5e-2), "user_agg mismatch"

    print("KERNEL_OK")
</pallas_src>

<mosaic_0001>
module attributes {stable_mosaic.version = 11 : i64} {
  func.func @aggregator_kernel(%arg0: memref<48x64xf32, #tpu.memory_space<vmem>>, %arg1: memref<16x64xf32, #tpu.memory_space<vmem>>, %arg2: memref<8x64xf32, #tpu.memory_space<vmem>>, %arg3: memref<64x64xf32, #tpu.memory_space<vmem>>, %arg4: memref<64x64xf32, #tpu.memory_space<vmem>>, %arg5: memref<128x1xi32, #tpu.memory_space<vmem>>, %arg6: memref<128x1xi32, #tpu.memory_space<vmem>>, %arg7: memref<1x128xi32, #tpu.memory_space<vmem>>, %arg8: memref<64x1xi32, #tpu.memory_space<vmem>>, %arg9: memref<1x64xi32, #tpu.memory_space<vmem>>, %arg10: memref<64x64xf32, #tpu.memory_space<vmem>>) attributes {dimension_semantics = [], scalar_prefetch = 0 : i64, scratch_operands = 0 : i64, tpu.core_type = #tpu.core_type<tc>} {
    %c0 = arith.constant 0 : index
    %c0_0 = arith.constant 0 : index
    %0 = vector.load %arg0[%c0, %c0_0] : memref<48x64xf32, #tpu.memory_space<vmem>>, vector<48x64xf32>
    %c0_1 = arith.constant 0 : index
    %c0_2 = arith.constant 0 : index
    %1 = vector.load %arg1[%c0_1, %c0_2] : memref<16x64xf32, #tpu.memory_space<vmem>>, vector<16x64xf32>
    %2 = tpu.concatenate %0, %1 in 0 : vector<48x64xf32>, vector<16x64xf32> -> vector<64x64xf32>
    %c0_3 = arith.constant 0 : index
    %c0_4 = arith.constant 0 : index
    %3 = vector.load %arg5[%c0_3, %c0_4] : memref<128x1xi32, #tpu.memory_space<vmem>>, vector<128x1xi32>
    %4 = tpu.iota {dimensions = array<i32: 1>} : vector<128x64xi32>
    %5 = vector.broadcast %3 : vector<128x1xi32> to vector<128x64xi32>
    %6 = arith.cmpi eq, %5, %4 : vector<128x64xi32>
    %cst = arith.constant 1.000000e+00 : f32
    %cst_5 = arith.constant 0.000000e+00 : f32
    %7 = vector.broadcast %cst : f32 to vector<128x64xf32>
    %8 = vector.broadcast %cst_5 : f32 to vector<128x64xf32>
    %9 = arith.select %6, %7, %8 : vector<128x64xi1>, vector<128x64xf32>
    %cst_6 = arith.constant dense<0.000000e+00> : vector<128x64xf32>
    %10 = tpu.matmul %9, %2, %cst_6 {dimension_numbers = #tpu.dot_dimension_numbers<[1], [0], [0], [1], [0, 0, 1, 1], [], []>} : vector<128x64xf32>, vector<64x64xf32>, vector<128x64xf32> -> vector<128x64xf32>
    %c0_7 = arith.constant 0 : index
    %c0_8 = arith.constant 0 : index
    %11 = vector.load %arg2[%c0_7, %c0_8] : memref<8x64xf32, #tpu.memory_space<vmem>>, vector<8x64xf32>
    %c0_9 = arith.constant 0 : index
    %c0_10 = arith.constant 0 : index
    %12 = vector.load %arg6[%c0_9, %c0_10] : memref<128x1xi32, #tpu.memory_space<vmem>>, vector<128x1xi32>
    %cst_11 = arith.constant 0.000000e+00 : f32
    %13 = vector.broadcast %cst_11 : f32 to vector<128x64xf32>
    %c0_i32 = arith.constant 0 : i32
    %14 = vector.broadcast %c0_i32 : i32 to vector<128x1xi32>
    %15 = arith.cmpi eq, %12, %14 : vector<128x1xi32>
    %16 = vector.extract_strided_slice %11 {offsets = [0, 0], sizes = [1, 64], strides = [1, 1]} : vector<8x64xf32> to vector<1x64xf32>
    %17 = vector.shape_cast %15 : vector<128x1xi1> to vector<128x1xi1>
    %18 = vector.broadcast %17 : vector<128x1xi1> to vector<128x64xi1>
    %19 = vector.shape_cast %16 : vector<1x64xf32> to vector<1x64xf32>
    %20 = vector.broadcast %19 : vector<1x64xf32> to vector<128x64xf32>
    %21 = arith.select %18, %20, %13 : vector<128x64xi1>, vector<128x64xf32>
    %c1_i32 = arith.constant 1 : i32
    %22 = vector.broadcast %c1_i32 : i32 to vector<128x1xi32>
    %23 = arith.cmpi eq, %12, %22 : vector<128x1xi32>
    %24 = vector.extract_strided_slice %11 {offsets = [1, 0], sizes = [1, 64], strides = [1, 1]} : vector<8x64xf32> to vector<1x64xf32>
    %25 = vector.shape_cast %23 : vector<128x1xi1> to vector<128x1xi1>
    %26 = vector.broadcast %25 : vector<128x1xi1> to vector<128x64xi1>
    %27 = vector.shape_cast %24 : vector<1x64xf32> to vector<1x64xf32>
    %28 = vector.broadcast %27 : vector<1x64xf32> to vector<128x64xf32>
    %29 = arith.select %26, %28, %21 : vector<128x64xi1>, vector<128x64xf32>
    %c2_i32 = arith.constant 2 : i32
    %30 = vector.broadcast %c2_i32 : i32 to vector<128x1xi32>
    %31 = arith.cmpi eq, %12, %30 : vector<128x1xi32>
    %32 = vector.extract_strided_slice %11 {offsets = [2, 0], sizes = [1, 64], strides = [1, 1]} : vector<8x64xf32> to vector<1x64xf32>
    %33 = vector.shape_cast %31 : vector<128x1xi1> to vector<128x1xi1>
    %34 = vector.broadcast %33 : vector<128x1xi1> to vector<128x64xi1>
    %35 = vector.shape_cast %32 : vector<1x64xf32> to vector<1x64xf32>
    %36 = vector.broadcast %35 : vector<1x64xf32> to vector<128x64xf32>
    %37 = arith.select %34, %36, %29 : vector<128x64xi1>, vector<128x64xf32>
    %c3_i32 = arith.constant 3 : i32
    %38 = vector.broadcast %c3_i32 : i32 to vector<128x1xi32>
    %39 = arith.cmpi eq, %12, %38 : vector<128x1xi32>
    %40 = vector.extract_strided_slice %11 {offsets = [3, 0], sizes = [1, 64], strides = [1, 1]} : vector<8x64xf32> to vector<1x64xf32>
    %41 = vector.shape_cast %39 : vector<128x1xi1> to vector<128x1xi1>
    %42 = vector.broadcast %41 : vector<128x1xi1> to vector<128x64xi1>
    %43 = vector.shape_cast %40 : vector<1x64xf32> to vector<1x64xf32>
    %44 = vector.broadcast %43 : vector<1x64xf32> to vector<128x64xf32>
    %45 = arith.select %42, %44, %37 : vector<128x64xi1>, vector<128x64xf32>
    %c4_i32 = arith.constant 4 : i32
    %46 = vector.broadcast %c4_i32 : i32 to vector<128x1xi32>
    %47 = arith.cmpi eq, %12, %46 : vector<128x1xi32>
    %48 = vector.extract_strided_slice %11 {offsets = [4, 0], sizes = [1, 64], strides = [1, 1]} : vector<8x64xf32> to vector<1x64xf32>
    %49 = vector.shape_cast %47 : vector<128x1xi1> to vector<128x1xi1>
    %50 = vector.broadcast %49 : vector<128x1xi1> to vector<128x64xi1>
    %51 = vector.shape_cast %48 : vector<1x64xf32> to vector<1x64xf32>
    %52 = vector.broadcast %51 : vector<1x64xf32> to vector<128x64xf32>
    %53 = arith.select %50, %52, %45 : vector<128x64xi1>, vector<128x64xf32>
    %c5_i32 = arith.constant 5 : i32
    %54 = vector.broadcast %c5_i32 : i32 to vector<128x1xi32>
    %55 = arith.cmpi eq, %12, %54 : vector<128x1xi32>
    %56 = vector.extract_strided_slice %11 {offsets = [5, 0], sizes = [1, 64], strides = [1, 1]} : vector<8x64xf32> to vector<1x64xf32>
    %57 = vector.shape_cast %55 : vector<128x1xi1> to vector<128x1xi1>
    %58 = vector.broadcast %57 : vector<128x1xi1> to vector<128x64xi1>
    %59 = vector.shape_cast %56 : vector<1x64xf32> to vector<1x64xf32>
    %60 = vector.broadcast %59 : vector<1x64xf32> to vector<128x64xf32>
    %61 = arith.select %58, %60, %53 : vector<128x64xi1>, vector<128x64xf32>
    %c6_i32 = arith.constant 6 : i32
    %62 = vector.broadcast %c6_i32 : i32 to vector<128x1xi32>
    %63 = arith.cmpi eq, %12, %62 : vector<128x1xi32>
    %64 = vector.extract_strided_slice %11 {offsets = [6, 0], sizes = [1, 64], strides = [1, 1]} : vector<8x64xf32> to vector<1x64xf32>
    %65 = vector.shape_cast %63 : vector<128x1xi1> to vector<128x1xi1>
    %66 = vector.broadcast %65 : vector<128x1xi1> to vector<128x64xi1>
    %67 = vector.shape_cast %64 : vector<1x64xf32> to vector<1x64xf32>
    %68 = vector.broadcast %67 : vector<1x64xf32> to vector<128x64xf32>
    %69 = arith.select %66, %68, %61 : vector<128x64xi1>, vector<128x64xf32>
    %c7_i32 = arith.constant 7 : i32
    %70 = vector.broadcast %c7_i32 : i32 to vector<128x1xi32>
    %71 = arith.cmpi eq, %12, %70 : vector<128x1xi32>
    %72 = vector.extract_strided_slice %11 {offsets = [7, 0], sizes = [1, 64], strides = [1, 1]} : vector<8x64xf32> to vector<1x64xf32>
    %73 = vector.shape_cast %71 : vector<128x1xi1> to vector<128x1xi1>
    %74 = vector.broadcast %73 : vector<128x1xi1> to vector<128x64xi1>
    %75 = vector.shape_cast %72 : vector<1x64xf32> to vector<1x64xf32>
    %76 = vector.broadcast %75 : vector<1x64xf32> to vector<128x64xf32>
    %77 = arith.select %74, %76, %69 : vector<128x64xi1>, vector<128x64xf32>
    %78 = arith.mulf %10, %77 : vector<128x64xf32>
    %c0_12 = arith.constant 0 : index
    %c0_13 = arith.constant 0 : index
    %79 = vector.load %arg7[%c0_12, %c0_13] : memref<1x128xi32, #tpu.memory_space<vmem>>, vector<1x128xi32>
    %80 = tpu.iota {dimensions = array<i32: 0>} : vector<72x128xi32>
    %81 = vector.broadcast %79 : vector<1x128xi32> to vector<72x128xi32>
    %82 = arith.cmpi eq, %81, %80 : vector<72x128xi32>
    %cst_14 = arith.constant 1.000000e+00 : f32
    %cst_15 = arith.constant 0.000000e+00 : f32
    %83 = vector.broadcast %cst_14 : f32 to vector<72x128xf32>
    %84 = vector.broadcast %cst_15 : f32 to vector<72x128xf32>
    %85 = arith.select %82, %83, %84 : vector<72x128xi1>, vector<72x128xf32>
    %cst_16 = arith.constant dense<0.000000e+00> : vector<72xf32>
    %86 = vector.multi_reduction <add>, %85, %cst_16 [1] : vector<72x128xf32> to vector<72xf32>
    %87 = vector.shape_cast %86 : vector<72xf32> to vector<72x1xf32>
    %cst_17 = arith.constant 1.000000e+00 : f32
    %88 = vector.broadcast %cst_17 : f32 to vector<72x1xf32>
    %89 = arith.maximumf %87, %88 : vector<72x1xf32>
    %cst_18 = arith.constant dense<0.000000e+00> : vector<72x64xf32>
    %90 = tpu.matmul %85, %78, %cst_18 {dimension_numbers = #tpu.dot_dimension_numbers<[1], [0], [0], [1], [0, 0, 1, 1], [], []>} : vector<72x128xf32>, vector<128x64xf32>, vector<72x64xf32> -> vector<72x64xf32>
    %91 = vector.broadcast %89 : vector<72x1xf32> to vector<72x64xf32>
    %92 = arith.divf %90, %91 : vector<72x64xf32>
    %93 = vector.extract_strided_slice %92 {offsets = [0, 0], sizes = [24, 64], strides = [1, 1]} : vector<72x64xf32> to vector<24x64xf32>
    %94 = vector.extract_strided_slice %92 {offsets = [24, 0], sizes = [24, 64], strides = [1, 1]} : vector<72x64xf32> to vector<24x64xf32>
    %95 = vector.extract_strided_slice %92 {offsets = [48, 0], sizes = [24, 64], strides = [1, 1]} : vector<72x64xf32> to vector<24x64xf32>
    %96 = tpu.concatenate %93, %95 in 1 : vector<24x64xf32>, vector<24x64xf32> -> vector<24x128xf32>
    %c0_19 = arith.constant 0 : index
    %c0_20 = arith.constant 0 : index
    %97 = vector.load %arg3[%c0_19, %c0_20] : memref<64x64xf32, #tpu.memory_space<vmem>>, vector<64x64xf32>
    %c0_21 = arith.constant 0 : index
    %c0_22 = arith.constant 0 : index
    %98 = vector.load %arg4[%c0_21, %c0_22] : memref<64x64xf32, #tpu.memory_space<vmem>>, vector<64x64xf32>
    %99 = tpu.concatenate %97, %98 in 1 : vector<64x64xf32>, vector<64x64xf32> -> vector<64x128xf32>
    %cst_23 = arith.constant dense<0.000000e+00> : vector<24x64xf32>
    %100 = tpu.matmul %96, %99, %cst_23 {dimension_numbers = #tpu.dot_dimension_numbers<[1], [1], [0], [0], [0, 0, 1, 0], [], []>} : vector<24x128xf32>, vector<64x128xf32>, vector<24x64xf32> -> vector<24x64xf32>
    %101 = arith.negf %100 : vector<24x64xf32>
    %102 = math.exp %101 : vector<24x64xf32>
    %cst_24 = arith.constant 1.000000e+00 : f32
    %103 = vector.broadcast %cst_24 : f32 to vector<24x64xf32>
    %104 = arith.addf %103, %102 : vector<24x64xf32>
    %105 = arith.divf %103, %104 : vector<24x64xf32>
    %106 = arith.mulf %105, %93 : vector<24x64xf32>
    %cst_25 = arith.constant 1.000000e+00 : f32
    %107 = vector.broadcast %cst_25 : f32 to vector<24x64xf32>
    %108 = arith.subf %107, %105 : vector<24x64xf32>
    %109 = arith.mulf %108, %95 : vector<24x64xf32>
    %110 = arith.addf %106, %109 : vector<24x64xf32>
    %c0_26 = arith.constant 0 : index
    %c0_27 = arith.constant 0 : index
    %111 = vector.load %arg8[%c0_26, %c0_27] : memref<64x1xi32, #tpu.memory_space<vmem>>, vector<64x1xi32>
    %112 = tpu.iota {dimensions = array<i32: 1>} : vector<64x24xi32>
    %113 = vector.broadcast %111 : vector<64x1xi32> to vector<64x24xi32>
    %114 = arith.cmpi eq, %113, %112 : vector<64x24xi32>
    %cst_28 = arith.constant 1.000000e+00 : f32
    %cst_29 = arith.constant 0.000000e+00 : f32
    %115 = vector.broadcast %cst_28 : f32 to vector<64x24xf32>
    %116 = vector.broadcast %cst_29 : f32 to vector<64x24xf32>
    %117 = arith.select %114, %115, %116 : vector<64x24xi1>, vector<64x24xf32>
    %c0_30 = arith.constant 0 : index
    %c0_31 = arith.constant 0 : index
    %118 = vector.load %arg9[%c0_30, %c0_31] : memref<1x64xi32, #tpu.memory_space<vmem>>, vector<1x64xi32>
    %119 = tpu.iota {dimensions = array<i32: 0>} : vector<16x64xi32>
    %120 = vector.broadcast %118 : vector<1x64xi32> to vector<16x64xi32>
    %121 = arith.cmpi eq, %120, %119 : vector<16x64xi32>
    %cst_32 = arith.constant 1.000000e+00 : f32
    %cst_33 = arith.constant 0.000000e+00 : f32
    %122 = vector.broadcast %cst_32 : f32 to vector<16x64xf32>
    %123 = vector.broadcast %cst_33 : f32 to vector<16x64xf32>
    %124 = arith.select %121, %122, %123 : vector<16x64xi1>, vector<16x64xf32>
    %cst_34 = arith.constant dense<0.000000e+00> : vector<16x24xf32>
    %125 = tpu.matmul %124, %117, %cst_34 {dimension_numbers = #tpu.dot_dimension_numbers<[1], [0], [0], [1], [0, 0, 1, 1], [], []>} : vector<16x64xf32>, vector<64x24xf32>, vector<16x24xf32> -> vector<16x24xf32>
    %cst_35 = arith.constant dense<0.000000e+00> : vector<16x64xf32>
    %126 = tpu.matmul %125, %110, %cst_35 {dimension_numbers = #tpu.dot_dimension_numbers<[1], [0], [0], [1], [0, 0, 1, 1], [], []>} : vector<16x24xf32>, vector<24x64xf32>, vector<16x64xf32> -> vector<16x64xf32>
    %127 = tpu.concatenate %110, %94, %126 in 0 : vector<24x64xf32>, vector<24x64xf32>, vector<16x64xf32> -> vector<64x64xf32>
    %c0_36 = arith.constant 0 : index
    %c0_37 = arith.constant 0 : index
    %128 = vector.load %arg10[%c0_36, %c0_37] : memref<64x64xf32, #tpu.memory_space<vmem>>, vector<64x64xf32>
    tpu.vector_store %arg10[%c0_36, %c0_37], %127 {strides = array<i32>} : memref<64x64xf32, #tpu.memory_space<vmem>>, vector<64x64xf32>,
    return
  }
}

</mosaic_0001>

<llo_original>
// kernel: aggregator_forward.1
$region0: #{aggregator_forward.1}
  #allocation0 [shape = 'u32[]', space=smem, size = 0x4, offset = 0x4, fixed_abs, tag = 'smem constant byte address 0x4 - core index']
  #allocation1 [shape = 'u32[144,128]{1,0:T(1,128)}', space=vmem, size = 0x12000, scoped, tag = 'internal scratch']
  %s0 = inlined_call_operand.vmem [shape: f32[48,64], index: 0, kind: input, shape index: {}]
  %s1 = inlined_call_operand.vmem [shape: f32[16,64], index: 1, kind: input, shape index: {}]
  %s2 = inlined_call_operand.vmem [shape: f32[8,64], index: 2, kind: input, shape index: {}]
  %s3 = inlined_call_operand.vmem [shape: f32[64,64], index: 3, kind: input, shape index: {}]
  %s4 = inlined_call_operand.vmem [shape: f32[64,64], index: 4, kind: input, shape index: {}]
  %s5 = inlined_call_operand.vmem [shape: s32[128,1], index: 5, kind: input, shape index: {}]
  %s6 = inlined_call_operand.vmem [shape: s32[128,1], index: 6, kind: input, shape index: {}]
  %s7 = inlined_call_operand.vmem [shape: s32[1,128], index: 7, kind: input, shape index: {}]
  %s8 = inlined_call_operand.vmem [shape: s32[64,1], index: 8, kind: input, shape index: {}]
  %s9 = inlined_call_operand.vmem [shape: s32[1,64], index: 9, kind: input, shape index: {}]
  %s10 = inlined_call_operand.vmem [shape: f32[64,64], index: 10, kind: output, shape index: {}]
  %s11 = sld [smem:[#allocation0]]
  $region50: #{aggregator_forward.1} parent=0
    _
  %s13 = ssub.s32 1, %s11
  %s14 = scalar_select 0, %s13, %s11
  // Predicated region
  $region2: #{aggregator_forward.1} parent=0 // pred_check
    _
  $region3: #{aggregator_forward.1} parent=0 // pred_check_branch
    %16 = sbr.rel (0) target = $region5
  $region4: #{aggregator_forward.1} parent=0 // pred_region
    _
  $region5: #{aggregator_forward.1} parent=0 // pred_fallthru
    _
  // Predicated region
  $region6: #{aggregator_forward.1} parent=0 // pred_check
    _
  $region7: #{aggregator_forward.1} parent=0 // pred_check_branch
    %18 = sbr.rel (0) target = $region9
  $region8: #{aggregator_forward.1} parent=0 // pred_region
    _
  $region9: #{aggregator_forward.1} parent=0 // pred_fallthru
    _
  // Predicated region
  $region10: #{aggregator_forward.1} parent=0 // pred_check
    _
  $region11: #{aggregator_forward.1} parent=0 // pred_check_branch
    %20 = sbr.rel (0) target = $region13
  $region12: #{aggregator_forward.1} parent=0 // pred_region
    _
  $region13: #{aggregator_forward.1} parent=0 // pred_fallthru
    _
  // Predicated region
  $region14: #{aggregator_forward.1} parent=0 // pred_check
    _
  $region15: #{aggregator_forward.1} parent=0 // pred_check_branch
    %22 = sbr.rel (0) target = $region17
  $region16: #{aggregator_forward.1} parent=0 // pred_region
    _
  $region17: #{aggregator_forward.1} parent=0 // pred_fallthru
    _
  // Predicated region
  $region18: #{aggregator_forward.1} parent=0 // pred_check
    _
  $region19: #{aggregator_forward.1} parent=0 // pred_check_branch
    %24 = sbr.rel (0) target = $region21
  $region20: #{aggregator_forward.1} parent=0 // pred_region
    _
  $region21: #{aggregator_forward.1} parent=0 // pred_fallthru
    _
  // Predicated region
  $region22: #{aggregator_forward.1} parent=0 // pred_check
    _
  $region23: #{aggregator_forward.1} parent=0 // pred_check_branch
    %26 = sbr.rel (0) target = $region25
  $region24: #{aggregator_forward.1} parent=0 // pred_region
    _
  $region25: #{aggregator_forward.1} parent=0 // pred_fallthru
    _
  // Predicated region
  $region26: #{aggregator_forward.1} parent=0 // pred_check
    _
  $region27: #{aggregator_forward.1} parent=0 // pred_check_branch
    %28 = sbr.rel (0) target = $region29
  $region28: #{aggregator_forward.1} parent=0 // pred_region
    _
  $region29: #{aggregator_forward.1} parent=0 // pred_fallthru
    _
  // Predicated region
  $region30: #{aggregator_forward.1} parent=0 // pred_check
    _
  $region31: #{aggregator_forward.1} parent=0 // pred_check_branch
    %30 = sbr.rel (0) target = $region33
  $region32: #{aggregator_forward.1} parent=0 // pred_region
    _
  $region33: #{aggregator_forward.1} parent=0 // pred_fallthru
    _
  // Predicated region
  $region34: #{aggregator_forward.1} parent=0 // pred_check
    _
  $region35: #{aggregator_forward.1} parent=0 // pred_check_branch
    %32 = sbr.rel (0) target = $region37
  $region36: #{aggregator_forward.1} parent=0 // pred_region
    _
  $region37: #{aggregator_forward.1} parent=0 // pred_fallthru
    _
  // Predicated region
  $region38: #{aggregator_forward.1} parent=0 // pred_check
    _
  $region39: #{aggregator_forward.1} parent=0 // pred_check_branch
    %34 = sbr.rel (0) target = $region41
  $region40: #{aggregator_forward.1} parent=0 // pred_region
    _
  $region41: #{aggregator_forward.1} parent=0 // pred_fallthru
    _
  %v35 = vld [vmem:[%s0] sm:$0xff]
  %v36 = vld [vmem:[%s0 + $0x8] sm:$0xff]
  %v37 = vld [vmem:[%s0 + $0x10] sm:$0xff]
  %v38 = vld [vmem:[%s0 + $0x18] sm:$0xff]
  %v39 = vld [vmem:[%s0 + $0x20] sm:$0xff]
  %v40 = vld [vmem:[%s0 + $0x28] sm:$0xff]
  %v41 = vld [vmem:[%s1] sm:$0xff]
  %v42 = vld [vmem:[%s1 + $0x8] sm:$0xff]
  %v43 = vld [vmem:[%s5] sm:$0xff]
  %v44 = vld [vmem:[%s5 + $0x8] sm:$0xff]
  %v45 = vld [vmem:[%s5 + $0x10] sm:$0xff]
  %v46 = vld [vmem:[%s5 + $0x18] sm:$0xff]
  %v47 = vld [vmem:[%s5 + $0x20] sm:$0xff]
  %v48 = vld [vmem:[%s5 + $0x28] sm:$0xff]
  %v49 = vld [vmem:[%s5 + $0x30] sm:$0xff]
  %v50 = vld [vmem:[%s5 + $0x38] sm:$0xff]
  %v51 = vld [vmem:[%s5 + $0x40] sm:$0xff]
  %v52 = vld [vmem:[%s5 + $0x48] sm:$0xff]
  %v53 = vld [vmem:[%s5 + $0x50] sm:$0xff]
  %v54 = vld [vmem:[%s5 + $0x58] sm:$0xff]
  %v55 = vld [vmem:[%s5 + $0x60] sm:$0xff]
  %v56 = vld [vmem:[%s5 + $0x68] sm:$0xff]
  %v57 = vld [vmem:[%s5 + $0x70] sm:$0xff]
  %v58 = vld [vmem:[%s5 + $0x78] sm:$0xff]
  %v59 = vlaneseq
  %v60 = vand.u32 %v59, 127
  %61 = vset.pattern.permute.xlu0 0
  %62 = vperm.xlu0 %61, %v43
  %v63 = vpop.permute.xlu0 %62
  %64 = vset.pattern.permute.xlu0 0
  %65 = vperm.xlu0 %64, %v44
  %v66 = vpop.permute.xlu0 %65
  %67 = vset.pattern.permute.xlu0 0
  %68 = vperm.xlu0 %67, %v45
  %v69 = vpop.permute.xlu0 %68
  %70 = vset.pattern.permute.xlu0 0
  %71 = vperm.xlu0 %70, %v46
  %v72 = vpop.permute.xlu0 %71
  %73 = vset.pattern.permute.xlu0 0
  %74 = vperm.xlu0 %73, %v47
  %v75 = vpop.permute.xlu0 %74
  %76 = vset.pattern.permute.xlu0 0
  %77 = vperm.xlu0 %76, %v48
  %v78 = vpop.permute.xlu0 %77
  %79 = vset.pattern.permute.xlu0 0
  %80 = vperm.xlu0 %79, %v49
  %v81 = vpop.permute.xlu0 %80
  %82 = vset.pattern.permute.xlu0 0
  %83 = vperm.xlu0 %82, %v50
  %v84 = vpop.permute.xlu0 %83
  %85 = vset.pattern.permute.xlu0 0
  %86 = vperm.xlu0 %85, %v51
  %v87 = vpop.permute.xlu0 %86
  %88 = vset.pattern.permute.xlu0 0
  %89 = vperm.xlu0 %88, %v52
  %v90 = vpop.permute.xlu0 %89
  %91 = vset.pattern.permute.xlu0 0
  %92 = vperm.xlu0 %91, %v53
  %v93 = vpop.permute.xlu0 %92
  %94 = vset.pattern.permute.xlu0 0
  %95 = vperm.xlu0 %94, %v54
  %v96 = vpop.permute.xlu0 %95
  %97 = vset.pattern.permute.xlu0 0
  %98 = vperm.xlu0 %97, %v55
  %v99 = vpop.permute.xlu0 %98
  %100 = vset.pattern.permute.xlu0 0
  %101 = vperm.xlu0 %100, %v56
  %v102 = vpop.permute.xlu0 %101
  %103 = vset.pattern.permute.xlu0 0
  %104 = vperm.xlu0 %103, %v57
  %v105 = vpop.permute.xlu0 %104
  %106 = vset.pattern.permute.xlu0 0
  %107 = vperm.xlu0 %106, %v58
  %v108 = vpop.permute.xlu0 %107
  %vm109 = vcmp.eq.s32.totalorder %v63, %v60
  %vm110 = vcmp.eq.s32.totalorder %v66, %v60
  %vm111 = vcmp.eq.s32.totalorder %v69, %v60
  %vm112 = vcmp.eq.s32.totalorder %v72, %v60
  %vm113 = vcmp.eq.s32.totalorder %v75, %v60
  %vm114 = vcmp.eq.s32.totalorder %v78, %v60
  %vm115 = vcmp.eq.s32.totalorder %v81, %v60
  %vm116 = vcmp.eq.s32.totalorder %v84, %v60
  %vm117 = vcmp.eq.s32.totalorder %v87, %v60
  %vm118 = vcmp.eq.s32.totalorder %v90, %v60
  %vm119 = vcmp.eq.s32.totalorder %v93, %v60
  %vm120 = vcmp.eq.s32.totalorder %v96, %v60
  %vm121 = vcmp.eq.s32.totalorder %v99, %v60
  %vm122 = vcmp.eq.s32.totalorder %v102, %v60
  %vm123 = vcmp.eq.s32.totalorder %v105, %v60
  %vm124 = vcmp.eq.s32.totalorder %v108, %v60
  %v125 = vsel %vm109, 1.0, 0.0
  %v126 = vsel %vm110, 1.0, 0.0
  %v127 = vsel %vm111, 1.0, 0.0
  %v128 = vsel %vm112, 1.0, 0.0
  %v129 = vsel %vm113, 1.0, 0.0
  %v130 = vsel %vm114, 1.0, 0.0
  %v131 = vsel %vm115, 1.0, 0.0
  %v132 = vsel %vm116, 1.0, 0.0
  %v133 = vsel %vm117, 1.0, 0.0
  %v134 = vsel %vm118, 1.0, 0.0
  %v135 = vsel %vm119, 1.0, 0.0
  %v136 = vsel %vm120, 1.0, 0.0
  %v137 = vsel %vm121, 1.0, 0.0
  %v138 = vsel %vm122, 1.0, 0.0
  %v139 = vsel %vm123, 1.0, 0.0
  %v140 = vsel %vm124, 1.0, 0.0
  %vm141 = vcmask 523264
  %v143 = vsel %vm141, %v125, 0
  %v146 = vsel %vm141, %v126, 0
  %v149 = vsel %vm141, %v127, 0
  %v152 = vsel %vm141, %v128, 0
  %v155 = vsel %vm141, %v129, 0
  %v158 = vsel %vm141, %v130, 0
  %v161 = vsel %vm141, %v131, 0
  %v164 = vsel %vm141, %v132, 0
  %v167 = vsel %vm141, %v133, 0
  %v170 = vsel %vm141, %v134, 0
  %v173 = vsel %vm141, %v135, 0
  %v176 = vsel %vm141, %v136, 0
  %v179 = vsel %vm141, %v137, 0
  %v182 = vsel %vm141, %v138, 0
  %v185 = vsel %vm141, %v139, 0
  %v188 = vsel %vm141, %v140, 0
  %190 = vmatprep.subr.mxu0 0.0
  %191 = vmatpush1.msra.mxu0 %v35
  %192 = vmatprep.subr.mxu0 0.0
  %193 = vmatpush1.msra.mxu0 %v36
  %194 = vmatprep.subr.mxu0 0.0
  %195 = vmatpush1.msra.mxu0 %v37
  %196 = vmatprep.subr.mxu0 0.0
  %197 = vmatpush1.msra.mxu0 %v38
  %198 = vmatprep.subr.mxu0 0.0
  %199 = vmatpush1.msra.mxu0 %v39
  %200 = vmatprep.subr.mxu0 0.0
  %201 = vmatpush1.msra.mxu0 %v40
  %202 = vmatprep.subr.mxu0 0.0
  %203 = vmatpush1.msra.mxu0 %v41
  %204 = vmatprep.subr.mxu0 0.0
  %205 = vmatpush1.msra.mxu0 %v42
  %206 = vmatprep.subr.mxu0 0.0
  %207 = vmatpush1.msra.mxu0 0.0
  %208 = vmatprep.subr.mxu0 0.0
  %209 = vmatpush1.msra.mxu0 0.0
  %210 = vmatprep.subr.mxu0 0.0
  %211 = vmatpush1.msra.mxu0 0.0
  %212 = vmatprep.subr.mxu0 0.0
  %213 = vmatpush1.msra.mxu0 0.0
  %214 = vmatprep.subr.mxu0 0.0
  %215 = vmatpush1.msra.mxu0 0.0
  %216 = vmatprep.subr.mxu0 0.0
  %217 = vmatpush1.msra.mxu0 0.0
  %218 = vmatprep.subr.mxu0 0.0
  %219 = vmatpush1.msra.mxu0 0.0
  %220 = vmatprep.subr.mxu0 0.0
  %221 = vmatpush1.msra.mxu0 0.0
  %222 = vmatprep.subr.mxu0 0.0
  %223 = vmatpush1.msra.mxu0 0.0
  %224 = vmatprep.subr.mxu0 0.0
  %225 = vmatpush1.msra.mxu0 0.0
  %226 = vmatprep.subr.mxu0 0.0
  %227 = vmatpush1.msra.mxu0 0.0
  %228 = vmatprep.subr.mxu0 0.0
  %229 = vmatpush1.msra.mxu0 0.0
  %230 = vmatprep.subr.mxu0 0.0
  %231 = vmatpush1.msra.mxu0 0.0
  %232 = vmatprep.subr.mxu0 0.0
  %233 = vmatpush1.msra.mxu0 0.0
  %234 = vmatprep.subr.mxu0 0.0
  %235 = vmatpush1.msra.mxu0 0.0
  %236 = vmatprep.subr.mxu0 0.0
  %237 = vmatpush1.msra.mxu0 0.0
  %238 = vmatprep.subr.mxu0 0.0
  %239 = vmatpush1.msra.mxu0 0.0
  %240 = vmatprep.subr.mxu0 0.0
  %241 = vmatpush1.msra.mxu0 0.0
  %242 = vmatprep.subr.mxu0 0.0
  %243 = vmatpush1.msra.mxu0 0.0
  %244 = vmatprep.subr.mxu0 0.0
  %245 = vmatpush1.msra.mxu0 0.0
  %246 = vmatprep.subr.mxu0 0.0
  %247 = vmatpush1.msra.mxu0 0.0
  %248 = vmatprep.subr.mxu0 0.0
  %249 = vmatpush1.msra.mxu0 0.0
  %250 = vmatprep.subr.mxu0 0.0
  %251 = vmatpush1.msra.mxu0 0.0
  %252 = vmatprep.subr.mxu0 0.0
  %253 = vmatpush1.msra.mxu0 0.0
  %254 = vmatprep.mubr.f32.mxu0 0.0
  %255 = vmatmul.mubr.f32.gmra.mrb[0].mxu0 %v143
  %v256 = vpop.f32.mrb[0].mxu0
  %v257 = vadd.f32 0.0, %v256
  %v258 = vpop.f32.mrb[0].mxu0
  %259 = vmatprep.mubr.f32.mxu0 0.0
  %260 = vmatmul.mubr.f32.gmra.mrb[0].mxu0 %v146
  %v261 = vpop.f32.mrb[0].mxu0
  %v262 = vadd.f32 0.0, %v261
  %v263 = vpop.f32.mrb[0].mxu0
  %264 = vmatprep.mubr.f32.mxu0 0.0
  %265 = vmatmul.mubr.f32.gmra.mrb[0].mxu0 %v149
  %v266 = vpop.f32.mrb[0].mxu0
  %v267 = vadd.f32 0.0, %v266
  %v268 = vpop.f32.mrb[0].mxu0
  %269 = vmatprep.mubr.f32.mxu0 0.0
  %270 = vmatmul.mubr.f32.gmra.mrb[0].mxu0 %v152
  %v271 = vpop.f32.mrb[0].mxu0
  %v272 = vadd.f32 0.0, %v271
  %v273 = vpop.f32.mrb[0].mxu0
  %274 = vmatprep.mubr.f32.mxu0 0.0
  %275 = vmatmul.mubr.f32.gmra.mrb[0].mxu0 %v155
  %v276 = vpop.f32.mrb[0].mxu0
  %v277 = vadd.f32 0.0, %v276
  %v278 = vpop.f32.mrb[0].mxu0
  %279 = vmatprep.mubr.f32.mxu0 0.0
  %280 = vmatmul.mubr.f32.gmra.mrb[0].mxu0 %v158
  %v281 = vpop.f32.mrb[0].mxu0
  %v282 = vadd.f32 0.0, %v281
  %v283 = vpop.f32.mrb[0].mxu0
  %284 = vmatprep.mubr.f32.mxu0 0.0
  %285 = vmatmul.mubr.f32.gmra.mrb[0].mxu0 %v161
  %v286 = vpop.f32.mrb[0].mxu0
  %v287 = vadd.f32 0.0, %v286
  %v288 = vpop.f32.mrb[0].mxu0
  %289 = vmatprep.mubr.f32.mxu0 0.0
  %290 = vmatmul.mubr.f32.gmra.mrb[0].mxu0 %v164
  %v291 = vpop.f32.mrb[0].mxu0
  %v292 = vadd.f32 0.0, %v291
  %v293 = vpop.f32.mrb[0].mxu0
  %294 = vmatprep.mubr.f32.mxu0 0.0
  %295 = vmatmul.mubr.f32.gmra.mrb[0].mxu0 %v167
  %v296 = vpop.f32.mrb[0].mxu0
  %v297 = vadd.f32 0.0, %v296
  %v298 = vpop.f32.mrb[0].mxu0
  %299 = vmatprep.mubr.f32.mxu0 0.0
  %300 = vmatmul.mubr.f32.gmra.mrb[0].mxu0 %v170
  %v301 = vpop.f32.mrb[0].mxu0
  %v302 = vadd.f32 0.0, %v301
  %v303 = vpop.f32.mrb[0].mxu0
  %304 = vmatprep.mubr.f32.mxu0 0.0
  %305 = vmatmul.mubr.f32.gmra.mrb[0].mxu0 %v173
  %v306 = vpop.f32.mrb[0].mxu0
  %v307 = vadd.f32 0.0, %v306
  %v308 = vpop.f32.mrb[0].mxu0
  %309 = vmatprep.mubr.f32.mxu0 0.0
  %310 = vmatmul.mubr.f32.gmra.mrb[0].mxu0 %v176
  %v311 = vpop.f32.mrb[0].mxu0
  %v312 = vadd.f32 0.0, %v311
  %v313 = vpop.f32.mrb[0].mxu0
  %314 = vmatprep.mubr.f32.mxu0 0.0
  %315 = vmatmul.mubr.f32.gmra.mrb[0].mxu0 %v179
  %v316 = vpop.f32.mrb[0].mxu0
  %v317 = vadd.f32 0.0, %v316
  %v318 = vpop.f32.mrb[0].mxu0
  %319 = vmatprep.mubr.f32.mxu0 0.0
  %320 = vmatmul.mubr.f32.gmra.mrb[0].mxu0 %v182
  %v321 = vpop.f32.mrb[0].mxu0
  %v322 = vadd.f32 0.0, %v321
  %v323 = vpop.f32.mrb[0].mxu0
  %324 = vmatprep.mubr.f32.mxu0 0.0
  %325 = vmatmul.mubr.f32.gmra.mrb[0].mxu0 %v185
  %v326 = vpop.f32.mrb[0].mxu0
  %v327 = vadd.f32 0.0, %v326
  %v328 = vpop.f32.mrb[0].mxu0
  %329 = vmatprep.mubr.f32.mxu0 0.0
  %330 = vmatmul.mubr.f32.gmra.mrb[0].mxu0 %v188
  %v331 = vpop.f32.mrb[0].mxu0
  %v332 = vadd.f32 0.0, %v331
  %v333 = vpop.f32.mrb[0].mxu0
  %334 = vdwg.mxu0
  %v335 = vld [vmem:[%s2] sm:$0xff]
  %v336 = vld [vmem:[%s6] sm:$0xff]
  %v337 = vld [vmem:[%s6 + $0x8] sm:$0xff]
  %v338 = vld [vmem:[%s6 + $0x10] sm:$0xff]
  %v339 = vld [vmem:[%s6 + $0x18] sm:$0xff]
  %v340 = vld [vmem:[%s6 + $0x20] sm:$0xff]
  %v341 = vld [vmem:[%s6 + $0x28] sm:$0xff]
  %v342 = vld [vmem:[%s6 + $0x30] sm:$0xff]
  %v343 = vld [vmem:[%s6 + $0x38] sm:$0xff]
  %v344 = vld [vmem:[%s6 + $0x40] sm:$0xff]
  %v345 = vld [vmem:[%s6 + $0x48] sm:$0xff]
  %v346 = vld [vmem:[%s6 + $0x50] sm:$0xff]
  %v347 = vld [vmem:[%s6 + $0x58] sm:$0xff]
  %v348 = vld [vmem:[%s6 + $0x60] sm:$0xff]
  %v349 = vld [vmem:[%s6 + $0x68] sm:$0xff]
  %v350 = vld [vmem:[%s6 + $0x70] sm:$0xff]
  %v351 = vld [vmem:[%s6 + $0x78] sm:$0xff]
  %vm352 = vcmp.eq.s32.totalorder %v336, 0
  %vm353 = vcmp.eq.s32.totalorder %v337, 0
  %vm354 = vcmp.eq.s32.totalorder %v338, 0
  %vm355 = vcmp.eq.s32.totalorder %v339, 0
  %vm356 = vcmp.eq.s32.totalorder %v340, 0
  %vm357 = vcmp.eq.s32.totalorder %v341, 0
  %vm358 = vcmp.eq.s32.totalorder %v342, 0
  %vm359 = vcmp.eq.s32.totalorder %v343, 0
  %vm360 = vcmp.eq.s32.totalorder %v344, 0
  %vm361 = vcmp.eq.s32.totalorder %v345, 0
  %vm362 = vcmp.eq.s32.totalorder %v346, 0
  %vm363 = vcmp.eq.s32.totalorder %v347, 0
  %vm364 = vcmp.eq.s32.totalorder %v348, 0
  %vm365 = vcmp.eq.s32.totalorder %v349, 0
  %vm366 = vcmp.eq.s32.totalorder %v350, 0
  %vm367 = vcmp.eq.s32.totalorder %v351, 0
  %v368 = vsel %vm352, 1, 0
  %v369 = vsel %vm353, 1, 0
  %v370 = vsel %vm354, 1, 0
  %v371 = vsel %vm355, 1, 0
  %v372 = vsel %vm356, 1, 0
  %v373 = vsel %vm357, 1, 0
  %v374 = vsel %vm358, 1, 0
  %v375 = vsel %vm359, 1, 0
  %v376 = vsel %vm360, 1, 0
  %v377 = vsel %vm361, 1, 0
  %v378 = vsel %vm362, 1, 0
  %v379 = vsel %vm363, 1, 0
  %v380 = vsel %vm364, 1, 0
  %v381 = vsel %vm365, 1, 0
  %v382 = vsel %vm366, 1, 0
  %v383 = vsel %vm367, 1, 0
  %384 = vset.pattern.permute.xlu0 0
  %385 = vperm.xlu0 %384, %v368
  %v386 = vpop.permute.xlu0 %385
  %387 = vset.pattern.permute.xlu0 0
  %388 = vperm.xlu0 %387, %v369
  %v389 = vpop.permute.xlu0 %388
  %390 = vset.pattern.permute.xlu0 0
  %391 = vperm.xlu0 %390, %v370
  %v392 = vpop.permute.xlu0 %391
  %393 = vset.pattern.permute.xlu0 0
  %394 = vperm.xlu0 %393, %v371
  %v395 = vpop.permute.xlu0 %394
  %396 = vset.pattern.permute.xlu0 0
  %397 = vperm.xlu0 %396, %v372
  %v398 = vpop.permute.xlu0 %397
  %399 = vset.pattern.permute.xlu0 0
  %400 = vperm.xlu0 %399, %v373
  %v401 = vpop.permute.xlu0 %400
  %402 = vset.pattern.permute.xlu0 0
  %403 = vperm.xlu0 %402, %v374
  %v404 = vpop.permute.xlu0 %403
  %405 = vset.pattern.permute.xlu0 0
  %406 = vperm.xlu0 %405, %v375
  %v407 = vpop.permute.xlu0 %406
  %408 = vset.pattern.permute.xlu0 0
  %409 = vperm.xlu0 %408, %v376
  %v410 = vpop.permute.xlu0 %409
  %411 = vset.pattern.permute.xlu0 0
  %412 = vperm.xlu0 %411, %v377
  %v413 = vpop.permute.xlu0 %412
  %414 = vset.pattern.permute.xlu0 0
  %415 = vperm.xlu0 %414, %v378
  %v416 = vpop.permute.xlu0 %415
  %417 = vset.pattern.permute.xlu0 0
  %418 = vperm.xlu0 %417, %v379
  %v419 = vpop.permute.xlu0 %418
  %420 = vset.pattern.permute.xlu0 0
  %421 = vperm.xlu0 %420, %v380
  %v422 = vpop.permute.xlu0 %421
  %423 = vset.pattern.permute.xlu0 0
  %424 = vperm.xlu0 %423, %v381
  %v425 = vpop.permute.xlu0 %424
  %426 = vset.pattern.permute.xlu0 0
  %427 = vperm.xlu0 %426, %v382
  %v428 = vpop.permute.xlu0 %427
  %429 = vset.pattern.permute.xlu0 0
  %430 = vperm.xlu0 %429, %v383
  %v431 = vpop.permute.xlu0 %430
  %vm432 = vcmp.eq.s32.totalorder %v386, 1
  %vm433 = vcmp.eq.s32.totalorder %v389, 1
  %vm434 = vcmp.eq.s32.totalorder %v392, 1
  %vm435 = vcmp.eq.s32.totalorder %v395, 1
  %vm436 = vcmp.eq.s32.totalorder %v398, 1
  %vm437 = vcmp.eq.s32.totalorder %v401, 1
  %vm438 = vcmp.eq.s32.totalorder %v404, 1
  %vm439 = vcmp.eq.s32.totalorder %v407, 1
  %vm440 = vcmp.eq.s32.totalorder %v410, 1
  %vm441 = vcmp.eq.s32.totalorder %v413, 1
  %vm442 = vcmp.eq.s32.totalorder %v416, 1
  %vm443 = vcmp.eq.s32.totalorder %v419, 1
  %vm444 = vcmp.eq.s32.totalorder %v422, 1
  %vm445 = vcmp.eq.s32.totalorder %v425, 1
  %vm446 = vcmp.eq.s32.totalorder %v428, 1
  %vm447 = vcmp.eq.s32.totalorder %v431, 1
  %v448 = vlaneseq
  %v449 = vshrl.u32 %v448, 7
  %v450 = vsub.s32 0, %v449
  %v451 = vrot.slane %v335, %v450
  %v452 = vsel %vm432, %v451, 0.0
  %v453 = vsel %vm433, %v451, 0.0
  %v454 = vsel %vm434, %v451, 0.0
  %v455 = vsel %vm435, %v451, 0.0
  %v456 = vsel %vm436, %v451, 0.0
  %v457 = vsel %vm437, %v451, 0.0
  %v458 = vsel %vm438, %v451, 0.0
  %v459 = vsel %vm439, %v451, 0.0
  %v460 = vsel %vm440, %v451, 0.0
  %v461 = vsel %vm441, %v451, 0.0
  %v462 = vsel %vm442, %v451, 0.0
  %v463 = vsel %vm443, %v451, 0.0
  %v464 = vsel %vm444, %v451, 0.0
  %v465 = vsel %vm445, %v451, 0.0
  %v466 = vsel %vm446, %v451, 0.0
  %v467 = vsel %vm447, %v451, 0.0
  %vm468 = vcmp.eq.s32.totalorder %v336, 1
  %vm469 = vcmp.eq.s32.totalorder %v337, 1
  %vm470 = vcmp.eq.s32.totalorder %v338, 1
  %vm471 = vcmp.eq.s32.totalorder %v339, 1
  %vm472 = vcmp.eq.s32.totalorder %v340, 1
  %vm473 = vcmp.eq.s32.totalorder %v341, 1
  %vm474 = vcmp.eq.s32.totalorder %v342, 1
  %vm475 = vcmp.eq.s32.totalorder %v343, 1
  %vm476 = vcmp.eq.s32.totalorder %v344, 1
  %vm477 = vcmp.eq.s32.totalorder %v345, 1
  %vm478 = vcmp.eq.s32.totalorder %v346, 1
  %vm479 = vcmp.eq.s32.totalorder %v347, 1
  %vm480 = vcmp.eq.s32.totalorder %v348, 1
  %vm481 = vcmp.eq.s32.totalorder %v349, 1
  %vm482 = vcmp.eq.s32.totalorder %v350, 1
  %vm483 = vcmp.eq.s32.totalorder %v351, 1
  %v484 = vsel %vm468, 1, 0
  %v485 = vsel %vm469, 1, 0
  %v486 = vsel %vm470, 1, 0
  %v487 = vsel %vm471, 1, 0
  %v488 = vsel %vm472, 1, 0
  %v489 = vsel %vm473, 1, 0
  %v490 = vsel %vm474, 1, 0
  %v491 = vsel %vm475, 1, 0
  %v492 = vsel %vm476, 1, 0
  %v493 = vsel %vm477, 1, 0
  %v494 = vsel %vm478, 1, 0
  %v495 = vsel %vm479, 1, 0
  %v496 = vsel %vm480, 1, 0
  %v497 = vsel %vm481, 1, 0
  %v498 = vsel %vm482, 1, 0
  %v499 = vsel %vm483, 1, 0
  %500 = vset.pattern.permute.xlu0 0
  %501 = vperm.xlu0 %500, %v484
  %v502 = vpop.permute.xlu0 %501
  %503 = vset.pattern.permute.xlu0 0
  %504 = vperm.xlu0 %503, %v485
  %v505 = vpop.permute.xlu0 %504
  %506 = vset.pattern.permute.xlu0 0
  %507 = vperm.xlu0 %506, %v486
  %v508 = vpop.permute.xlu0 %507
  %509 = vset.pattern.permute.xlu0 0
  %510 = vperm.xlu0 %509, %v487
  %v511 = vpop.permute.xlu0 %510
  %512 = vset.pattern.permute.xlu0 0
  %513 = vperm.xlu0 %512, %v488
  %v514 = vpop.permute.xlu0 %513
  %515 = vset.pattern.permute.xlu0 0
  %516 = vperm.xlu0 %515, %v489
  %v517 = vpop.permute.xlu0 %516
  %518 = vset.pattern.permute.xlu0 0
  %519 = vperm.xlu0 %518, %v490
  %v520 = vpop.permute.xlu0 %519
  %521 = vset.pattern.permute.xlu0 0
  %522 = vperm.xlu0 %521, %v491
  %v523 = vpop.permute.xlu0 %522
  %524 = vset.pattern.permute.xlu0 0
  %525 = vperm.xlu0 %524, %v492
  %v526 = vpop.permute.xlu0 %525
  %527 = vset.pattern.permute.xlu0 0
  %528 = vperm.xlu0 %527, %v493
  %v529 = vpop.permute.xlu0 %528
  %530 = vset.pattern.permute.xlu0 0
  %531 = vperm.xlu0 %530, %v494
  %v532 = vpop.permute.xlu0 %531
  %533 = vset.pattern.permute.xlu0 0
  %534 = vperm.xlu0 %533, %v495
  %v535 = vpop.permute.xlu0 %534
  %536 = vset.pattern.permute.xlu0 0
  %537 = vperm.xlu0 %536, %v496
  %v538 = vpop.permute.xlu0 %537
  %539 = vset.pattern.permute.xlu0 0
  %540 = vperm.xlu0 %539, %v497
  %v541 = vpop.permute.xlu0 %540
  %542 = vset.pattern.permute.xlu0 0
  %543 = vperm.xlu0 %542, %v498
  %v544 = vpop.permute.xlu0 %543
  %545 = vset.pattern.permute.xlu0 0
  %546 = vperm.xlu0 %545, %v499
  %v547 = vpop.permute.xlu0 %546
  %vm548 = vcmp.eq.s32.totalorder %v502, 1
  %vm549 = vcmp.eq.s32.totalorder %v505, 1
  %vm550 = vcmp.eq.s32.totalorder %v508, 1
  %vm551 = vcmp.eq.s32.totalorder %v511, 1
  %vm552 = vcmp.eq.s32.totalorder %v514, 1
  %vm553 = vcmp.eq.s32.totalorder %v517, 1
  %vm554 = vcmp.eq.s32.totalorder %v520, 1
  %vm555 = vcmp.eq.s32.totalorder %v523, 1
  %vm556 = vcmp.eq.s32.totalorder %v526, 1
  %vm557 = vcmp.eq.s32.totalorder %v529, 1
  %vm558 = vcmp.eq.s32.totalorder %v532, 1
  %vm559 = vcmp.eq.s32.totalorder %v535, 1
  %vm560 = vcmp.eq.s32.totalorder %v538, 1
  %vm561 = vcmp.eq.s32.totalorder %v541, 1
  %vm562 = vcmp.eq.s32.totalorder %v544, 1
  %vm563 = vcmp.eq.s32.totalorder %v547, 1
  %v564 = vlaneseq
  %v565 = vshrl.u32 %v564, 7
  %v566 = vsub.s32 1, %v565
  %v567 = vrot.slane %v335, %v566
  %v568 = vsel %vm548, %v567, %v452
  %v569 = vsel %vm549, %v567, %v453
  %v570 = vsel %vm550, %v567, %v454
  %v571 = vsel %vm551, %v567, %v455
  %v572 = vsel %vm552, %v567, %v456
  %v573 = vsel %vm553, %v567, %v457
  %v574 = vsel %vm554, %v567, %v458
  %v575 = vsel %vm555, %v567, %v459
  %v576 = vsel %vm556, %v567, %v460
  %v577 = vsel %vm557, %v567, %v461
  %v578 = vsel %vm558, %v567, %v462
  %v579 = vsel %vm559, %v567, %v463
  %v580 = vsel %vm560, %v567, %v464
  %v581 = vsel %vm561, %v567, %v465
  %v582 = vsel %vm562, %v567, %v466
  %v583 = vsel %vm563, %v567, %v467
  %vm584 = vcmp.eq.s32.totalorder %v336, 2
  %vm585 = vcmp.eq.s32.totalorder %v337, 2
  %vm586 = vcmp.eq.s32.totalorder %v338, 2
  %vm587 = vcmp.eq.s32.totalorder %v339, 2
  %vm588 = vcmp.eq.s32.totalorder %v340, 2
  %vm589 = vcmp.eq.s32.totalorder %v341, 2
  %vm590 = vcmp.eq.s32.totalorder %v342, 2
  %vm591 = vcmp.eq.s32.totalorder %v343, 2
  %vm592 = vcmp.eq.s32.totalorder %v344, 2
  %vm593 = vcmp.eq.s32.totalorder %v345, 2
  %vm594 = vcmp.eq.s32.totalorder %v346, 2
  %vm595 = vcmp.eq.s32.totalorder %v347, 2
  %vm596 = vcmp.eq.s32.totalorder %v348, 2
  %vm597 = vcmp.eq.s32.totalorder %v349, 2
  %vm598 = vcmp.eq.s32.totalorder %v350, 2
  %vm599 = vcmp.eq.s32.totalorder %v351, 2
  %v600 = vsel %vm584, 1, 0
  %v601 = vsel %vm585, 1, 0
  %v602 = vsel %vm586, 1, 0
  %v603 = vsel %vm587, 1, 0
  %v604 = vsel %vm588, 1, 0
  %v605 = vsel %vm589, 1, 0
  %v606 = vsel %vm590, 1, 0
  %v607 = vsel %vm591, 1, 0
  %v608 = vsel %vm592, 1, 0
  %v609 = vsel %vm593, 1, 0
  %v610 = vsel %vm594, 1, 0
  %v611 = vsel %vm595, 1, 0
  %v612 = vsel %vm596, 1, 0
  %v613 = vsel %vm597, 1, 0
  %v614 = vsel %vm598, 1, 0
  %v615 = vsel %vm599, 1, 0
  %616 = vset.pattern.permute.xlu0 0
  %617 = vperm.xlu0 %616, %v600
  %v618 = vpop.permute.xlu0 %617
  %619 = vset.pattern.permute.xlu0 0
  %620 = vperm.xlu0 %619, %v601
  %v621 = vpop.permute.xlu0 %620
  %622 = vset.pattern.permute.xlu0 0
  %623 = vperm.xlu0 %622, %v602
  %v624 = vpop.permute.xlu0 %623
  %625 = vset.pattern.permute.xlu0 0
  %626 = vperm.xlu0 %625, %v603
  %v627 = vpop.permute.xlu0 %626
  %628 = vset.pattern.permute.xlu0 0
  %629 = vperm.xlu0 %628, %v604
  %v630 = vpop.permute.xlu0 %629
  %631 = vset.pattern.permute.xlu0 0
  %632 = vperm.xlu0 %631, %v605
  %v633 = vpop.permute.xlu0 %632
  %634 = vset.pattern.permute.xlu0 0
  %635 = vperm.xlu0 %634, %v606
  %v636 = vpop.permute.xlu0 %635
  %637 = vset.pattern.permute.xlu0 0
  %638 = vperm.xlu0 %637, %v607
  %v639 = vpop.permute.xlu0 %638
  %640 = vset.pattern.permute.xlu0 0
  %641 = vperm.xlu0 %640, %v608
  %v642 = vpop.permute.xlu0 %641
  %643 = vset.pattern.permute.xlu0 0
  %644 = vperm.xlu0 %643, %v609
  %v645 = vpop.permute.xlu0 %644
  %646 = vset.pattern.permute.xlu0 0
  %647 = vperm.xlu0 %646, %v610
  %v648 = vpop.permute.xlu0 %647
  %649 = vset.pattern.permute.xlu0 0
  %650 = vperm.xlu0 %649, %v611
  %v651 = vpop.permute.xlu0 %650
  %652 = vset.pattern.permute.xlu0 0
  %653 = vperm.xlu0 %652, %v612
  %v654 = vpop.permute.xlu0 %653
  %655 = vset.pattern.permute.xlu0 0
  %656 = vperm.xlu0 %655, %v613
  %v657 = vpop.permute.xlu0 %656
  %658 = vset.pattern.permute.xlu0 0
  %659 = vperm.xlu0 %658, %v614
  %v660 = vpop.permute.xlu0 %659
  %661 = vset.pattern.permute.xlu0 0
  %662 = vperm.xlu0 %661, %v615
  %v663 = vpop.permute.xlu0 %662
  %vm664 = vcmp.eq.s32.totalorder %v618, 1
  %vm665 = vcmp.eq.s32.totalorder %v621, 1
  %vm666 = vcmp.eq.s32.totalorder %v624, 1
  %vm667 = vcmp.eq.s32.totalorder %v627, 1
  %vm668 = vcmp.eq.s32.totalorder %v630, 1
  %vm669 = vcmp.eq.s32.totalorder %v633, 1
  %vm670 = vcmp.eq.s32.totalorder %v636, 1
  %vm671 = vcmp.eq.s32.totalorder %v639, 1
  %vm672 = vcmp.eq.s32.totalorder %v642, 1
  %vm673 = vcmp.eq.s32.totalorder %v645, 1
  %vm674 = vcmp.eq.s32.totalorder %v648, 1
  %vm675 = vcmp.eq.s32.totalorder %v651, 1
  %vm676 = vcmp.eq.s32.totalorder %v654, 1
  %vm677 = vcmp.eq.s32.totalorder %v657, 1
  %vm678 = vcmp.eq.s32.totalorder %v660, 1
  %vm679 = vcmp.eq.s32.totalorder %v663, 1
  %v680 = vlaneseq
  %v681 = vshrl.u32 %v680, 7
  %v682 = vsub.s32 2, %v681
  %v683 = vrot.slane %v335, %v682
  %v684 = vsel %vm664, %v683, %v568
  %v685 = vsel %vm665, %v683, %v569
  %v686 = vsel %vm666, %v683, %v570
  %v687 = vsel %vm667, %v683, %v571
  %v688 = vsel %vm668, %v683, %v572
  %v689 = vsel %vm669, %v683, %v573
  %v690 = vsel %vm670, %v683, %v574
  %v691 = vsel %vm671, %v683, %v575
  %v692 = vsel %vm672, %v683, %v576
  %v693 = vsel %vm673, %v683, %v577
  %v694 = vsel %vm674, %v683, %v578
  %v695 = vsel %vm675, %v683, %v579
  %v696 = vsel %vm676, %v683, %v580
  %v697 = vsel %vm677, %v683, %v581
  %v698 = vsel %vm678, %v683, %v582
  %v699 = vsel %vm679, %v683, %v583
  %vm700 = vcmp.eq.s32.totalorder %v336, 3
  %vm701 = vcmp.eq.s32.totalorder %v337, 3
  %vm702 = vcmp.eq.s32.totalorder %v338, 3
  %vm703 = vcmp.eq.s32.totalorder %v339, 3
  %vm704 = vcmp.eq.s32.totalorder %v340, 3
  %vm705 = vcmp.eq.s32.totalorder %v341, 3
  %vm706 = vcmp.eq.s32.totalorder %v342, 3
  %vm707 = vcmp.eq.s32.totalorder %v343, 3
  %vm708 = vcmp.eq.s32.totalorder %v344, 3
  %vm709 = vcmp.eq.s32.totalorder %v345, 3
  %vm710 = vcmp.eq.s32.totalorder %v346, 3
  %vm711 = vcmp.eq.s32.totalorder %v347, 3
  %vm712 = vcmp.eq.s32.totalorder %v348, 3
  %vm713 = vcmp.eq.s32.totalorder %v349, 3
  %vm714 = vcmp.eq.s32.totalorder %v350, 3
  %vm715 = vcmp.eq.s32.totalorder %v351, 3
  %v716 = vsel %vm700, 1, 0
  %v717 = vsel %vm701, 1, 0
  %v718 = vsel %vm702, 1, 0
  %v719 = vsel %vm703, 1, 0
  %v720 = vsel %vm704, 1, 0
  %v721 = vsel %vm705, 1, 0
  %v722 = vsel %vm706, 1, 0
  %v723 = vsel %vm707, 1, 0
  %v724 = vsel %vm708, 1, 0
  %v725 = vsel %vm709, 1, 0
  %v726 = vsel %vm710, 1, 0
  %v727 = vsel %vm711, 1, 0
  %v728 = vsel %vm712, 1, 0
  %v729 = vsel %vm713, 1, 0
  %v730 = vsel %vm714, 1, 0
  %v731 = vsel %vm715, 1, 0
  %732 = vset.pattern.permute.xlu0 0
  %733 = vperm.xlu0 %732, %v716
  %v734 = vpop.permute.xlu0 %733
  %735 = vset.pattern.permute.xlu0 0
  %736 = vperm.xlu0 %735, %v717
  %v737 = vpop.permute.xlu0 %736
  %738 = vset.pattern.permute.xlu0 0
  %739 = vperm.xlu0 %738, %v718
  %v740 = vpop.permute.xlu0 %739
  %741 = vset.pattern.permute.xlu0 0
  %742 = vperm.xlu0 %741, %v719
  %v743 = vpop.permute.xlu0 %742
  %744 = vset.pattern.permute.xlu0 0
  %745 = vperm.xlu0 %744, %v720
  %v746 = vpop.permute.xlu0 %745
  %747 = vset.pattern.permute.xlu0 0
  %748 = vperm.xlu0 %747, %v721
  %v749 = vpop.permute.xlu0 %748
  %750 = vset.pattern.permute.xlu0 0
  %751 = vperm.xlu0 %750, %v722
  %v752 = vpop.permute.xlu0 %751
  %753 = vset.pattern.permute.xlu0 0
  %754 = vperm.xlu0 %753, %v723
  %v755 = vpop.permute.xlu0 %754
  %756 = vset.pattern.permute.xlu0 0
  %757 = vperm.xlu0 %756, %v724
  %v758 = vpop.permute.xlu0 %757
  %759 = vset.pattern.permute.xlu0 0
  %760 = vperm.xlu0 %759, %v725
  %v761 = vpop.permute.xlu0 %760
  %762 = vset.pattern.permute.xlu0 0
  %763 = vperm.xlu0 %762, %v726
  %v764 = vpop.permute.xlu0 %763
  %765 = vset.pattern.permute.xlu0 0
  %766 = vperm.xlu0 %765, %v727
  %v767 = vpop.permute.xlu0 %766
  %768 = vset.pattern.permute.xlu0 0
  %769 = vperm.xlu0 %768, %v728
  %v770 = vpop.permute.xlu0 %769
  %771 = vset.pattern.permute.xlu0 0
  %772 = vperm.xlu0 %771, %v729
  %v773 = vpop.permute.xlu0 %772
  %774 = vset.pattern.permute.xlu0 0
  %775 = vperm.xlu0 %774, %v730
  %v776 = vpop.permute.xlu0 %775
  %777 = vset.pattern.permute.xlu0 0
  %778 = vperm.xlu0 %777, %v731
  %v779 = vpop.permute.xlu0 %778
  %vm780 = vcmp.eq.s32.totalorder %v734, 1
  %vm781 = vcmp.eq.s32.totalorder %v737, 1
  %vm782 = vcmp.eq.s32.totalorder %v740, 1
  %vm783 = vcmp.eq.s32.totalorder %v743, 1
  %vm784 = vcmp.eq.s32.totalorder %v746, 1
  %vm785 = vcmp.eq.s32.totalorder %v749, 1
  %vm786 = vcmp.eq.s32.totalorder %v752, 1
  %vm787 = vcmp.eq.s32.totalorder %v755, 1
  %vm788 = vcmp.eq.s32.totalorder %v758, 1
  %vm789 = vcmp.eq.s32.totalorder %v761, 1
  %vm790 = vcmp.eq.s32.totalorder %v764, 1
  %vm791 = vcmp.eq.s32.totalorder %v767, 1
  %vm792 = vcmp.eq.s32.totalorder %v770, 1
  %vm793 = vcmp.eq.s32.totalorder %v773, 1
  %vm794 = vcmp.eq.s32.totalorder %v776, 1
  %vm795 = vcmp.eq.s32.totalorder %v779, 1
  %v796 = vlaneseq
  %v797 = vshrl.u32 %v796, 7
  %v798 = vsub.s32 3, %v797
  %v799 = vrot.slane %v335, %v798
  %v800 = vsel %vm780, %v799, %v684
  %v801 = vsel %vm781, %v799, %v685
  %v802 = vsel %vm782, %v799, %v686
  %v803 = vsel %vm783, %v799, %v687
  %v804 = vsel %vm784, %v799, %v688
  %v805 = vsel %vm785, %v799, %v689
  %v806 = vsel %vm786, %v799, %v690
  %v807 = vsel %vm787, %v799, %v691
  %v808 = vsel %vm788, %v799, %v692
  %v809 = vsel %vm789, %v799, %v693
  %v810 = vsel %vm790, %v799, %v694
  %v811 = vsel %vm791, %v799, %v695
  %v812 = vsel %vm792, %v799, %v696
  %v813 = vsel %vm793, %v799, %v697
  %v814 = vsel %vm794, %v799, %v698
  %v815 = vsel %vm795, %v799, %v699
  %vm816 = vcmp.eq.s32.totalorder %v336, 4
  %vm817 = vcmp.eq.s32.totalorder %v337, 4
  %vm818 = vcmp.eq.s32.totalorder %v338, 4
  %vm819 = vcmp.eq.s32.totalorder %v339, 4
  %vm820 = vcmp.eq.s32.totalorder %v340, 4
  %vm821 = vcmp.eq.s32.totalorder %v341, 4
  %vm822 = vcmp.eq.s32.totalorder %v342, 4
  %vm823 = vcmp.eq.s32.totalorder %v343, 4
  %vm824 = vcmp.eq.s32.totalorder %v344, 4
  %vm825 = vcmp.eq.s32.totalorder %v345, 4
  %vm826 = vcmp.eq.s32.totalorder %v346, 4
  %vm827 = vcmp.eq.s32.totalorder %v347, 4
  %vm828 = vcmp.eq.s32.totalorder %v348, 4
  %vm829 = vcmp.eq.s32.totalorder %v349, 4
  %vm830 = vcmp.eq.s32.totalorder %v350, 4
  %vm831 = vcmp.eq.s32.totalorder %v351, 4
  %v832 = vsel %vm816, 1, 0
  %v833 = vsel %vm817, 1, 0
  %v834 = vsel %vm818, 1, 0
  %v835 = vsel %vm819, 1, 0
  %v836 = vsel %vm820, 1, 0
  %v837 = vsel %vm821, 1, 0
  %v838 = vsel %vm822, 1, 0
  %v839 = vsel %vm823, 1, 0
  %v840 = vsel %vm824, 1, 0
  %v841 = vsel %vm825, 1, 0
  %v842 = vsel %vm826, 1, 0
  %v843 = vsel %vm827, 1, 0
  %v844 = vsel %vm828, 1, 0
  %v845 = vsel %vm829, 1, 0
  %v846 = vsel %vm830, 1, 0
  %v847 = vsel %vm831, 1, 0
  %848 = vset.pattern.permute.xlu0 0
  %849 = vperm.xlu0 %848, %v832
  %v850 = vpop.permute.xlu0 %849
  %851 = vset.pattern.permute.xlu0 0
  %852 = vperm.xlu0 %851, %v833
  %v853 = vpop.permute.xlu0 %852
  %854 = vset.pattern.permute.xlu0 0
  %855 = vperm.xlu0 %854, %v834
  %v856 = vpop.permute.xlu0 %855
  %857 = vset.pattern.permute.xlu0 0
  %858 = vperm.xlu0 %857, %v835
  %v859 = vpop.permute.xlu0 %858
  %860 = vset.pattern.permute.xlu0 0
  %861 = vperm.xlu0 %860, %v836
  %v862 = vpop.permute.xlu0 %861
  %863 = vset.pattern.permute.xlu0 0
  %864 = vperm.xlu0 %863, %v837
  %v865 = vpop.permute.xlu0 %864
  %866 = vset.pattern.permute.xlu0 0
  %867 = vperm.xlu0 %866, %v838
  %v868 = vpop.permute.xlu0 %867
  %869 = vset.pattern.permute.xlu0 0
  %870 = vperm.xlu0 %869, %v839
  %v871 = vpop.permute.xlu0 %870
  %872 = vset.pattern.permute.xlu0 0
  %873 = vperm.xlu0 %872, %v840
  %v874 = vpop.permute.xlu0 %873
  %875 = vset.pattern.permute.xlu0 0
  %876 = vperm.xlu0 %875, %v841
  %v877 = vpop.permute.xlu0 %876
  %878 = vset.pattern.permute.xlu0 0
  %879 = vperm.xlu0 %878, %v842
  %v880 = vpop.permute.xlu0 %879
  %881 = vset.pattern.permute.xlu0 0
  %882 = vperm.xlu0 %881, %v843
  %v883 = vpop.permute.xlu0 %882
  %884 = vset.pattern.permute.xlu0 0
  %885 = vperm.xlu0 %884, %v844
  %v886 = vpop.permute.xlu0 %885
  %887 = vset.pattern.permute.xlu0 0
  %888 = vperm.xlu0 %887, %v845
  %v889 = vpop.permute.xlu0 %888
  %890 = vset.pattern.permute.xlu0 0
  %891 = vperm.xlu0 %890, %v846
  %v892 = vpop.permute.xlu0 %891
  %893 = vset.pattern.permute.xlu0 0
  %894 = vperm.xlu0 %893, %v847
  %v895 = vpop.permute.xlu0 %894
  %vm896 = vcmp.eq.s32.totalorder %v850, 1
  %vm897 = vcmp.eq.s32.totalorder %v853, 1
  %vm898 = vcmp.eq.s32.totalorder %v856, 1
  %vm899 = vcmp.eq.s32.totalorder %v859, 1
  %vm900 = vcmp.eq.s32.totalorder %v862, 1
  %vm901 = vcmp.eq.s32.totalorder %v865, 1
  %vm902 = vcmp.eq.s32.totalorder %v868, 1
  %vm903 = vcmp.eq.s32.totalorder %v871, 1
  %vm904 = vcmp.eq.s32.totalorder %v874, 1
  %vm905 = vcmp.eq.s32.totalorder %v877, 1
  %vm906 = vcmp.eq.s32.totalorder %v880, 1
  %vm907 = vcmp.eq.s32.totalorder %v883, 1
  %vm908 = vcmp.eq.s32.totalorder %v886, 1
  %vm909 = vcmp.eq.s32.totalorder %v889, 1
  %vm910 = vcmp.eq.s32.totalorder %v892, 1
  %vm911 = vcmp.eq.s32.totalorder %v895, 1
  %v912 = vlaneseq
  %v913 = vshrl.u32 %v912, 7
  %v914 = vsub.s32 4, %v913
  %v915 = vrot.slane %v335, %v914
  %v916 = vsel %vm896, %v915, %v800
  %v917 = vsel %vm897, %v915, %v801
  %v918 = vsel %vm898, %v915, %v802
  %v919 = vsel %vm899, %v915, %v803
  %v920 = vsel %vm900, %v915, %v804
  %v921 = vsel %vm901, %v915, %v805
  %v922 = vsel %vm902, %v915, %v806
  %v923 = vsel %vm903, %v915, %v807
  %v924 = vsel %vm904, %v915, %v808
  %v925 = vsel %vm905, %v915, %v809
  %v926 = vsel %vm906, %v915, %v810
  %v927 = vsel %vm907, %v915, %v811
  %v928 = vsel %vm908, %v915, %v812
  %v929 = vsel %vm909, %v915, %v813
  %v930 = vsel %vm910, %v915, %v814
  %v931 = vsel %vm911, %v915, %v815
  %vm932 = vcmp.eq.s32.totalorder %v336, 5
  %vm933 = vcmp.eq.s32.totalorder %v337, 5
  %vm934 = vcmp.eq.s32.totalorder %v338, 5
  %vm935 = vcmp.eq.s32.totalorder %v339, 5
  %vm936 = vcmp.eq.s32.totalorder %v340, 5
  %vm937 = vcmp.eq.s32.totalorder %v341, 5
  %vm938 = vcmp.eq.s32.totalorder %v342, 5
  %vm939 = vcmp.eq.s32.totalorder %v343, 5
  %vm940 = vcmp.eq.s32.totalorder %v344, 5
  %vm941 = vcmp.eq.s32.totalorder %v345, 5
  %vm942 = vcmp.eq.s32.totalorder %v346, 5
  %vm943 = vcmp.eq.s32.totalorder %v347, 5
  %vm944 = vcmp.eq.s32.totalorder %v348, 5
  %vm945 = vcmp.eq.s32.totalorder %v349, 5
  %vm946 = vcmp.eq.s32.totalorder %v350, 5
  %vm947 = vcmp.eq.s32.totalorder %v351, 5
  %v948 = vsel %vm932, 1, 0
  %v949 = vsel %vm933, 1, 0
  %v950 = vsel %vm934, 1, 0
  %v951 = vsel %vm935, 1, 0
  %v952 = vsel %vm936, 1, 0
  %v953 = vsel %vm937, 1, 0
  %v954 = vsel %vm938, 1, 0
  %v955 = vsel %vm939, 1, 0
  %v956 = vsel %vm940, 1, 0
  %v957 = vsel %vm941, 1, 0
  %v958 = vsel %vm942, 1, 0
  %v959 = vsel %vm943, 1, 0
  %v960 = vsel %vm944, 1, 0
  %v961 = vsel %vm945, 1, 0
  %v962 = vsel %vm946, 1, 0
  %v963 = vsel %vm947, 1, 0
  %964 = vset.pattern.permute.xlu0 0
  %965 = vperm.xlu0 %964, %v948
  %v966 = vpop.permute.xlu0 %965
  %967 = vset.pattern.permute.xlu0 0
  %968 = vperm.xlu0 %967, %v949
  %v969 = vpop.permute.xlu0 %968
  %970 = vset.pattern.permute.xlu0 0
  %971 = vperm.xlu0 %970, %v950
  %v972 = vpop.permute.xlu0 %971
  %973 = vset.pattern.permute.xlu0 0
  %974 = vperm.xlu0 %973, %v951
  %v975 = vpop.permute.xlu0 %974
  %976 = vset.pattern.permute.xlu0 0
  %977 = vperm.xlu0 %976, %v952
  %v978 = vpop.permute.xlu0 %977
  %979 = vset.pattern.permute.xlu0 0
  %980 = vperm.xlu0 %979, %v953
  %v981 = vpop.permute.xlu0 %980
  %982 = vset.pattern.permute.xlu0 0
  %983 = vperm.xlu0 %982, %v954
  %v984 = vpop.permute.xlu0 %983
  %985 = vset.pattern.permute.xlu0 0
  %986 = vperm.xlu0 %985, %v955
  %v987 = vpop.permute.xlu0 %986
  %988 = vset.pattern.permute.xlu0 0
  %989 = vperm.xlu0 %988, %v956
  %v990 = vpop.permute.xlu0 %989
  %991 = vset.pattern.permute.xlu0 0
  %992 = vperm.xlu0 %991, %v957
  %v993 = vpop.permute.xlu0 %992
  %994 = vset.pattern.permute.xlu0 0
  %995 = vperm.xlu0 %994, %v958
  %v996 = vpop.permute.xlu0 %995
  %997 = vset.pattern.permute.xlu0 0
  %998 = vperm.xlu0 %997, %v959
  %v999 = vpop.permute.xlu0 %998
  %1000 = vset.pattern.permute.xlu0 0
  %1001 = vperm.xlu0 %1000, %v960
  %v1002 = vpop.permute.xlu0 %1001
  %1003 = vset.pattern.permute.xlu0 0
  %1004 = vperm.xlu0 %1003, %v961
  %v1005 = vpop.permute.xlu0 %1004
  %1006 = vset.pattern.permute.xlu0 0
  %1007 = vperm.xlu0 %1006, %v962
  %v1008 = vpop.permute.xlu0 %1007
  %1009 = vset.pattern.permute.xlu0 0
  %1010 = vperm.xlu0 %1009, %v963
  %v1011 = vpop.permute.xlu0 %1010
  %vm1012 = vcmp.eq.s32.totalorder %v966, 1
  %vm1013 = vcmp.eq.s32.totalorder %v969, 1
  %vm1014 = vcmp.eq.s32.totalorder %v972, 1
  %vm1015 = vcmp.eq.s32.totalorder %v975, 1
  %vm1016 = vcmp.eq.s32.totalorder %v978, 1
  %vm1017 = vcmp.eq.s32.totalorder %v981, 1
  %vm1018 = vcmp.eq.s32.totalorder %v984, 1
  %vm1019 = vcmp.eq.s32.totalorder %v987, 1
  %vm1020 = vcmp.eq.s32.totalorder %v990, 1
  %vm1021 = vcmp.eq.s32.totalorder %v993, 1
  %vm1022 = vcmp.eq.s32.totalorder %v996, 1
  %vm1023 = vcmp.eq.s32.totalorder %v999, 1
  %vm1024 = vcmp.eq.s32.totalorder %v1002, 1
  %vm1025 = vcmp.eq.s32.totalorder %v1005, 1
  %vm1026 = vcmp.eq.s32.totalorder %v1008, 1
  %vm1027 = vcmp.eq.s32.totalorder %v1011, 1
  %v1028 = vlaneseq
  %v1029 = vshrl.u32 %v1028, 7
  %v1030 = vsub.s32 5, %v1029
  %v1031 = vrot.slane %v335, %v1030
  %v1032 = vsel %vm1012, %v1031, %v916
  %v1033 = vsel %vm1013, %v1031, %v917
  %v1034 = vsel %vm1014, %v1031, %v918
  %v1035 = vsel %vm1015, %v1031, %v919
  %v1036 = vsel %vm1016, %v1031, %v920
  %v1037 = vsel %vm1017, %v1031, %v921
  %v1038 = vsel %vm1018, %v1031, %v922
  %v1039 = vsel %vm1019, %v1031, %v923
  %v1040 = vsel %vm1020, %v1031, %v924
  %v1041 = vsel %vm1021, %v1031, %v925
  %v1042 = vsel %vm1022, %v1031, %v926
  %v1043 = vsel %vm1023, %v1031, %v927
  %v1044 = vsel %vm1024, %v1031, %v928
  %v1045 = vsel %vm1025, %v1031, %v929
  %v1046 = vsel %vm1026, %v1031, %v930
  %v1047 = vsel %vm1027, %v1031, %v931
  %vm1048 = vcmp.eq.s32.totalorder %v336, 6
  %vm1049 = vcmp.eq.s32.totalorder %v337, 6
  %vm1050 = vcmp.eq.s32.totalorder %v338, 6
  %vm1051 = vcmp.eq.s32.totalorder %v339, 6
  %vm1052 = vcmp.eq.s32.totalorder %v340, 6
  %vm1053 = vcmp.eq.s32.totalorder %v341, 6
  %vm1054 = vcmp.eq.s32.totalorder %v342, 6
  %vm1055 = vcmp.eq.s32.totalorder %v343, 6
  %vm1056 = vcmp.eq.s32.totalorder %v344, 6
  %vm1057 = vcmp.eq.s32.totalorder %v345, 6
  %vm1058 = vcmp.eq.s32.totalorder %v346, 6
  %vm1059 = vcmp.eq.s32.totalorder %v347, 6
  %vm1060 = vcmp.eq.s32.totalorder %v348, 6
  %vm1061 = vcmp.eq.s32.totalorder %v349, 6
  %vm1062 = vcmp.eq.s32.totalorder %v350, 6
  %vm1063 = vcmp.eq.s32.totalorder %v351, 6
  %v1064 = vsel %vm1048, 1, 0
  %v1065 = vsel %vm1049, 1, 0
  %v1066 = vsel %vm1050, 1, 0
  %v1067 = vsel %vm1051, 1, 0
  %v1068 = vsel %vm1052, 1, 0
  %v1069 = vsel %vm1053, 1, 0
  %v1070 = vsel %vm1054, 1, 0
  %v1071 = vsel %vm1055, 1, 0
  %v1072 = vsel %vm1056, 1, 0
  %v1073 = vsel %vm1057, 1, 0
  %v1074 = vsel %vm1058, 1, 0
  %v1075 = vsel %vm1059, 1, 0
  %v1076 = vsel %vm1060, 1, 0
  %v1077 = vsel %vm1061, 1, 0
  %v1078 = vsel %vm1062, 1, 0
  %v1079 = vsel %vm1063, 1, 0
  %1080 = vset.pattern.permute.xlu0 0
  %1081 = vperm.xlu0 %1080, %v1064
  %v1082 = vpop.permute.xlu0 %1081
  %1083 = vset.pattern.permute.xlu0 0
  %1084 = vperm.xlu0 %1083, %v1065
  %v1085 = vpop.permute.xlu0 %1084
  %1086 = vset.pattern.permute.xlu0 0
  %1087 = vperm.xlu0 %1086, %v1066
  %v1088 = vpop.permute.xlu0 %1087
  %1089 = vset.pattern.permute.xlu0 0
  %1090 = vperm.xlu0 %1089, %v1067
  %v1091 = vpop.permute.xlu0 %1090
  %1092 = vset.pattern.permute.xlu0 0
  %1093 = vperm.xlu0 %1092, %v1068
  %v1094 = vpop.permute.xlu0 %1093
  %1095 = vset.pattern.permute.xlu0 0
  %1096 = vperm.xlu0 %1095, %v1069
  %v1097 = vpop.permute.xlu0 %1096
  %1098 = vset.pattern.permute.xlu0 0
  %1099 = vperm.xlu0 %1098, %v1070
  %v1100 = vpop.permute.xlu0 %1099
  %1101 = vset.pattern.permute.xlu0 0
  %1102 = vperm.xlu0 %1101, %v1071
  %v1103 = vpop.permute.xlu0 %1102
  %1104 = vset.pattern.permute.xlu0 0
  %1105 = vperm.xlu0 %1104, %v1072
  %v1106 = vpop.permute.xlu0 %1105
  %1107 = vset.pattern.permute.xlu0 0
  %1108 = vperm.xlu0 %1107, %v1073
  %v1109 = vpop.permute.xlu0 %1108
  %1110 = vset.pattern.permute.xlu0 0
  %1111 = vperm.xlu0 %1110, %v1074
  %v1112 = vpop.permute.xlu0 %1111
  %1113 = vset.pattern.permute.xlu0 0
  %1114 = vperm.xlu0 %1113, %v1075
  %v1115 = vpop.permute.xlu0 %1114
  %1116 = vset.pattern.permute.xlu0 0
  %1117 = vperm.xlu0 %1116, %v1076
  %v1118 = vpop.permute.xlu0 %1117
  %1119 = vset.pattern.permute.xlu0 0
  %1120 = vperm.xlu0 %1119, %v1077
  %v1121 = vpop.permute.xlu0 %1120
  %1122 = vset.pattern.permute.xlu0 0
  %1123 = vperm.xlu0 %1122, %v1078
  %v1124 = vpop.permute.xlu0 %1123
  %1125 = vset.pattern.permute.xlu0 0
  %1126 = vperm.xlu0 %1125, %v1079
  %v1127 = vpop.permute.xlu0 %1126
  %vm1128 = vcmp.eq.s32.totalorder %v1082, 1
  %vm1129 = vcmp.eq.s32.totalorder %v1085, 1
  %vm1130 = vcmp.eq.s32.totalorder %v1088, 1
  %vm1131 = vcmp.eq.s32.totalorder %v1091, 1
  %vm1132 = vcmp.eq.s32.totalorder %v1094, 1
  %vm1133 = vcmp.eq.s32.totalorder %v1097, 1
  %vm1134 = vcmp.eq.s32.totalorder %v1100, 1
  %vm1135 = vcmp.eq.s32.totalorder %v1103, 1
  %vm1136 = vcmp.eq.s32.totalorder %v1106, 1
  %vm1137 = vcmp.eq.s32.totalorder %v1109, 1
  %vm1138 = vcmp.eq.s32.totalorder %v1112, 1
  %vm1139 = vcmp.eq.s32.totalorder %v1115, 1
  %vm1140 = vcmp.eq.s32.totalorder %v1118, 1
  %vm1141 = vcmp.eq.s32.totalorder %v1121, 1
  %vm1142 = vcmp.eq.s32.totalorder %v1124, 1
  %vm1143 = vcmp.eq.s32.totalorder %v1127, 1
  %v1144 = vlaneseq
  %v1145 = vshrl.u32 %v1144, 7
  %v1146 = vsub.s32 6, %v1145
  %v1147 = vrot.slane %v335, %v1146
  %v1148 = vsel %vm1128, %v1147, %v1032
  %v1149 = vsel %vm1129, %v1147, %v1033
  %v1150 = vsel %vm1130, %v1147, %v1034
  %v1151 = vsel %vm1131, %v1147, %v1035
  %v1152 = vsel %vm1132, %v1147, %v1036
  %v1153 = vsel %vm1133, %v1147, %v1037
  %v1154 = vsel %vm1134, %v1147, %v1038
  %v1155 = vsel %vm1135, %v1147, %v1039
  %v1156 = vsel %vm1136, %v1147, %v1040
  %v1157 = vsel %vm1137, %v1147, %v1041
  %v1158 = vsel %vm1138, %v1147, %v1042
  %v1159 = vsel %vm1139, %v1147, %v1043
  %v1160 = vsel %vm1140, %v1147, %v1044
  %v1161 = vsel %vm1141, %v1147, %v1045
  %v1162 = vsel %vm1142, %v1147, %v1046
  %v1163 = vsel %vm1143, %v1147, %v1047
  %vm1164 = vcmp.eq.s32.totalorder %v336, 7
  %vm1165 = vcmp.eq.s32.totalorder %v337, 7
  %vm1166 = vcmp.eq.s32.totalorder %v338, 7
  %vm1167 = vcmp.eq.s32.totalorder %v339, 7
  %vm1168 = vcmp.eq.s32.totalorder %v340, 7
  %vm1169 = vcmp.eq.s32.totalorder %v341, 7
  %vm1170 = vcmp.eq.s32.totalorder %v342, 7
  %vm1171 = vcmp.eq.s32.totalorder %v343, 7
  %vm1172 = vcmp.eq.s32.totalorder %v344, 7
  %vm1173 = vcmp.eq.s32.totalorder %v345, 7
  %vm1174 = vcmp.eq.s32.totalorder %v346, 7
  %vm1175 = vcmp.eq.s32.totalorder %v347, 7
  %vm1176 = vcmp.eq.s32.totalorder %v348, 7
  %vm1177 = vcmp.eq.s32.totalorder %v349, 7
  %vm1178 = vcmp.eq.s32.totalorder %v350, 7
  %vm1179 = vcmp.eq.s32.totalorder %v351, 7
  %v1180 = vsel %vm1164, 1, 0
  %v1181 = vsel %vm1165, 1, 0
  %v1182 = vsel %vm1166, 1, 0
  %v1183 = vsel %vm1167, 1, 0
  %v1184 = vsel %vm1168, 1, 0
  %v1185 = vsel %vm1169, 1, 0
  %v1186 = vsel %vm1170, 1, 0
  %v1187 = vsel %vm1171, 1, 0
  %v1188 = vsel %vm1172, 1, 0
  %v1189 = vsel %vm1173, 1, 0
  %v1190 = vsel %vm1174, 1, 0
  %v1191 = vsel %vm1175, 1, 0
  %v1192 = vsel %vm1176, 1, 0
  %v1193 = vsel %vm1177, 1, 0
  %v1194 = vsel %vm1178, 1, 0
  %v1195 = vsel %vm1179, 1, 0
  %1196 = vset.pattern.permute.xlu0 0
  %1197 = vperm.xlu0 %1196, %v1180
  %v1198 = vpop.permute.xlu0 %1197
  %1199 = vset.pattern.permute.xlu0 0
  %1200 = vperm.xlu0 %1199, %v1181
  %v1201 = vpop.permute.xlu0 %1200
  %1202 = vset.pattern.permute.xlu0 0
  %1203 = vperm.xlu0 %1202, %v1182
  %v1204 = vpop.permute.xlu0 %1203
  %1205 = vset.pattern.permute.xlu0 0
  %1206 = vperm.xlu0 %1205, %v1183
  %v1207 = vpop.permute.xlu0 %1206
  %1208 = vset.pattern.permute.xlu0 0
  %1209 = vperm.xlu0 %1208, %v1184
  %v1210 = vpop.permute.xlu0 %1209
  %1211 = vset.pattern.permute.xlu0 0
  %1212 = vperm.xlu0 %1211, %v1185
  %v1213 = vpop.permute.xlu0 %1212
  %1214 = vset.pattern.permute.xlu0 0
  %1215 = vperm.xlu0 %1214, %v1186
  %v1216 = vpop.permute.xlu0 %1215
  %1217 = vset.pattern.permute.xlu0 0
  %1218 = vperm.xlu0 %1217, %v1187
  %v1219 = vpop.permute.xlu0 %1218
  %1220 = vset.pattern.permute.xlu0 0
  %1221 = vperm.xlu0 %1220, %v1188
  %v1222 = vpop.permute.xlu0 %1221
  %1223 = vset.pattern.permute.xlu0 0
  %1224 = vperm.xlu0 %1223, %v1189
  %v1225 = vpop.permute.xlu0 %1224
  %1226 = vset.pattern.permute.xlu0 0
  %1227 = vperm.xlu0 %1226, %v1190
  %v1228 = vpop.permute.xlu0 %1227
  %1229 = vset.pattern.permute.xlu0 0
  %1230 = vperm.xlu0 %1229, %v1191
  %v1231 = vpop.permute.xlu0 %1230
  %1232 = vset.pattern.permute.xlu0 0
  %1233 = vperm.xlu0 %1232, %v1192
  %v1234 = vpop.permute.xlu0 %1233
  %1235 = vset.pattern.permute.xlu0 0
  %1236 = vperm.xlu0 %1235, %v1193
  %v1237 = vpop.permute.xlu0 %1236
  %1238 = vset.pattern.permute.xlu0 0
  %1239 = vperm.xlu0 %1238, %v1194
  %v1240 = vpop.permute.xlu0 %1239
  %1241 = vset.pattern.permute.xlu0 0
  %1242 = vperm.xlu0 %1241, %v1195
  %v1243 = vpop.permute.xlu0 %1242
  %vm1244 = vcmp.eq.s32.totalorder %v1198, 1
  %vm1245 = vcmp.eq.s32.totalorder %v1201, 1
  %vm1246 = vcmp.eq.s32.totalorder %v1204, 1
  %vm1247 = vcmp.eq.s32.totalorder %v1207, 1
  %vm1248 = vcmp.eq.s32.totalorder %v1210, 1
  %vm1249 = vcmp.eq.s32.totalorder %v1213, 1
  %vm1250 = vcmp.eq.s32.totalorder %v1216, 1
  %vm1251 = vcmp.eq.s32.totalorder %v1219, 1
  %vm1252 = vcmp.eq.s32.totalorder %v1222, 1
  %vm1253 = vcmp.eq.s32.totalorder %v1225, 1
  %vm1254 = vcmp.eq.s32.totalorder %v1228, 1
  %vm1255 = vcmp.eq.s32.totalorder %v1231, 1
  %vm1256 = vcmp.eq.s32.totalorder %v1234, 1
  %vm1257 = vcmp.eq.s32.totalorder %v1237, 1
  %vm1258 = vcmp.eq.s32.totalorder %v1240, 1
  %vm1259 = vcmp.eq.s32.totalorder %v1243, 1
  %v1260 = vlaneseq
  %v1261 = vshrl.u32 %v1260, 7
  %v1262 = vsub.s32 7, %v1261
  %v1263 = vrot.slane %v335, %v1262
  %v1264 = vsel %vm1244, %v1263, %v1148
  %v1265 = vsel %vm1245, %v1263, %v1149
  %v1266 = vsel %vm1246, %v1263, %v1150
  %v1267 = vsel %vm1247, %v1263, %v1151
  %v1268 = vsel %vm1248, %v1263, %v1152
  %v1269 = vsel %vm1249, %v1263, %v1153
  %v1270 = vsel %vm1250, %v1263, %v1154
  %v1271 = vsel %vm1251, %v1263, %v1155
  %v1272 = vsel %vm1252, %v1263, %v1156
  %v1273 = vsel %vm1253, %v1263, %v1157
  %v1274 = vsel %vm1254, %v1263, %v1158
  %v1275 = vsel %vm1255, %v1263, %v1159
  %v1276 = vsel %vm1256, %v1263, %v1160
  %v1277 = vsel %vm1257, %v1263, %v1161
  %v1278 = vsel %vm1258, %v1263, %v1162
  %v1279 = vsel %vm1259, %v1263, %v1163
  %v1280 = vmul.f32 %v257, %v1264
  %v1281 = vmul.f32 %v262, %v1265
  %v1282 = vmul.f32 %v267, %v1266
  %v1283 = vmul.f32 %v272, %v1267
  %v1284 = vmul.f32 %v277, %v1268
  %v1285 = vmul.f32 %v282, %v1269
  %v1286 = vmul.f32 %v287, %v1270
  %v1287 = vmul.f32 %v292, %v1271
  %v1288 = vmul.f32 %v297, %v1272
  %v1289 = vmul.f32 %v302, %v1273
  %v1290 = vmul.f32 %v307, %v1274
  %v1291 = vmul.f32 %v312, %v1275
  %v1292 = vmul.f32 %v317, %v1276
  %v1293 = vmul.f32 %v322, %v1277
  %v1294 = vmul.f32 %v327, %v1278
  %v1295 = vmul.f32 %v332, %v1279
  %v1296 = vld [vmem:[%s7] sm:$0x1]
  %v1297 = vlaneseq
  %v1298 = vshrl.u32 %v1297, 7
  %v1299 = vadd.s32 %v1298, 8
  %v1300 = vadd.s32 %v1298, 16
  %v1301 = vadd.s32 %v1298, 24
  %v1302 = vadd.s32 %v1298, 32
  %v1303 = vadd.s32 %v1298, 40
  %v1304 = vadd.s32 %v1298, 48
  %v1305 = vadd.s32 %v1298, 56
  %v1306 = vadd.s32 %v1298, 64
  %v1307 = vlaneseq
  %v1308 = vshrl.u32 %v1307, 7
  %v1309 = vsub.s32 0, %v1308
  %v1310 = vrot.slane %v1296, %v1309
  %vm1311 = vcmp.eq.s32.totalorder %v1310, %v1298
  %vm1312 = vcmp.eq.s32.totalorder %v1310, %v1299
  %vm1313 = vcmp.eq.s32.totalorder %v1310, %v1300
  %vm1314 = vcmp.eq.s32.totalorder %v1310, %v1301
  %vm1315 = vcmp.eq.s32.totalorder %v1310, %v1302
  %vm1316 = vcmp.eq.s32.totalorder %v1310, %v1303
  %vm1317 = vcmp.eq.s32.totalorder %v1310, %v1304
  %vm1318 = vcmp.eq.s32.totalorder %v1310, %v1305
  %vm1319 = vcmp.eq.s32.totalorder %v1310, %v1306
  %v1320 = vsel %vm1311, 1.0, 0.0
  %v1321 = vsel %vm1312, 1.0, 0.0
  %v1322 = vsel %vm1313, 1.0, 0.0
  %v1323 = vsel %vm1314, 1.0, 0.0
  %v1324 = vsel %vm1315, 1.0, 0.0
  %v1325 = vsel %vm1316, 1.0, 0.0
  %v1326 = vsel %vm1317, 1.0, 0.0
  %v1327 = vsel %vm1318, 1.0, 0.0
  %v1328 = vsel %vm1319, 1.0, 0.0
  %1329 = vadd.xlane.f32.xlu0 %v1320
  %v1330 = vpop.xlane.xlu0 %1329
  %1331 = vadd.xlane.f32.xlu0 %v1321
  %v1332 = vpop.xlane.xlu0 %1331
  %1333 = vadd.xlane.f32.xlu0 %v1322
  %v1334 = vpop.xlane.xlu0 %1333
  %1335 = vadd.xlane.f32.xlu0 %v1323
  %v1336 = vpop.xlane.xlu0 %1335
  %1337 = vadd.xlane.f32.xlu0 %v1324
  %v1338 = vpop.xlane.xlu0 %1337
  %1339 = vadd.xlane.f32.xlu0 %v1325
  %v1340 = vpop.xlane.xlu0 %1339
  %1341 = vadd.xlane.f32.xlu0 %v1326
  %v1342 = vpop.xlane.xlu0 %1341
  %1343 = vadd.xlane.f32.xlu0 %v1327
  %v1344 = vpop.xlane.xlu0 %1343
  %1345 = vadd.xlane.f32.xlu0 %v1328
  %v1346 = vpop.xlane.xlu0 %1345
  %v1347 = vmax.f32 %v1330, 1.0
  %v1348 = vmax.f32 %v1332, 1.0
  %v1349 = vmax.f32 %v1334, 1.0
  %v1350 = vmax.f32 %v1336, 1.0
  %v1351 = vmax.f32 %v1338, 1.0
  %v1352 = vmax.f32 %v1340, 1.0
  %v1353 = vmax.f32 %v1342, 1.0
  %v1354 = vmax.f32 %v1344, 1.0
  %v1355 = vmax.f32 %v1346, 1.0
  %1356 = vmatprep.subr.mxu0 0.0
  %1357 = vmatpush1.msra.mxu0 %v1280
  %1358 = vmatprep.subr.mxu0 0.0
  %1359 = vmatpush1.msra.mxu0 %v1281
  %1360 = vmatprep.subr.mxu0 0.0
  %1361 = vmatpush1.msra.mxu0 %v1282
  %1362 = vmatprep.subr.mxu0 0.0
  %1363 = vmatpush1.msra.mxu0 %v1283
  %1364 = vmatprep.subr.mxu0 0.0
  %1365 = vmatpush1.msra.mxu0 %v1284
  %1366 = vmatprep.subr.mxu0 0.0
  %1367 = vmatpush1.msra.mxu0 %v1285
  %1368 = vmatprep.subr.mxu0 0.0
  %1369 = vmatpush1.msra.mxu0 %v1286
  %1370 = vmatprep.subr.mxu0 0.0
  %1371 = vmatpush1.msra.mxu0 %v1287
  %1372 = vmatprep.subr.mxu0 0.0
  %1373 = vmatpush1.msra.mxu0 %v1288
  %1374 = vmatprep.subr.mxu0 0.0
  %1375 = vmatpush1.msra.mxu0 %v1289
  %1376 = vmatprep.subr.mxu0 0.0
  %1377 = vmatpush1.msra.mxu0 %v1290
  %1378 = vmatprep.subr.mxu0 0.0
  %1379 = vmatpush1.msra.mxu0 %v1291
  %1380 = vmatprep.subr.mxu0 0.0
  %1381 = vmatpush1.msra.mxu0 %v1292
  %1382 = vmatprep.subr.mxu0 0.0
  %1383 = vmatpush1.msra.mxu0 %v1293
  %1384 = vmatprep.subr.mxu0 0.0
  %1385 = vmatpush1.msra.mxu0 %v1294
  %1386 = vmatprep.subr.mxu0 0.0
  %1387 = vmatpush1.msra.mxu0 %v1295
  %1388 = vmatprep.subr.mxu0 0.0
  %1389 = vmatpush1.msra.mxu0 0.0
  %1390 = vmatprep.subr.mxu0 0.0
  %1391 = vmatpush1.msra.mxu0 0.0
  %1392 = vmatprep.subr.mxu0 0.0
  %1393 = vmatpush1.msra.mxu0 0.0
  %1394 = vmatprep.subr.mxu0 0.0
  %1395 = vmatpush1.msra.mxu0 0.0
  %1396 = vmatprep.subr.mxu0 0.0
  %1397 = vmatpush1.msra.mxu0 0.0
  %1398 = vmatprep.subr.mxu0 0.0
  %1399 = vmatpush1.msra.mxu0 0.0
  %1400 = vmatprep.subr.mxu0 0.0
  %1401 = vmatpush1.msra.mxu0 0.0
  %1402 = vmatprep.subr.mxu0 0.0
  %1403 = vmatpush1.msra.mxu0 0.0
  %1404 = vmatprep.subr.mxu0 0.0
  %1405 = vmatpush1.msra.mxu0 0.0
  %1406 = vmatprep.subr.mxu0 0.0
  %1407 = vmatpush1.msra.mxu0 0.0
  %1408 = vmatprep.subr.mxu0 0.0
  %1409 = vmatpush1.msra.mxu0 0.0
  %1410 = vmatprep.subr.mxu0 0.0
  %1411 = vmatpush1.msra.mxu0 0.0
  %1412 = vmatprep.subr.mxu0 0.0
  %1413 = vmatpush1.msra.mxu0 0.0
  %1414 = vmatprep.subr.mxu0 0.0
  %1415 = vmatpush1.msra.mxu0 0.0
  %1416 = vmatprep.subr.mxu0 0.0
  %1417 = vmatpush1.msra.mxu0 0.0
  %1418 = vmatprep.subr.mxu0 0.0
  %1419 = vmatpush1.msra.mxu0 0.0
  %1420 = vmatprep.mubr.f32.mxu0 0.0
  %1421 = vmatmul.mubr.f32.gmra.mrb[0].mxu0 %v1320
  %v1422 = vpop.f32.mrb[0].mxu0
  %v1423 = vadd.f32 0.0, %v1422
  %v1424 = vpop.f32.mrb[0].mxu0
  %1425 = vmatprep.mubr.f32.mxu0 0.0
  %1426 = vmatmul.mubr.f32.gmra.mrb[0].mxu0 %v1321
  %v1427 = vpop.f32.mrb[0].mxu0
  %v1428 = vadd.f32 0.0, %v1427
  %v1429 = vpop.f32.mrb[0].mxu0
  %1430 = vmatprep.mubr.f32.mxu0 0.0
  %1431 = vmatmul.mubr.f32.gmra.mrb[0].mxu0 %v1322
  %v1432 = vpop.f32.mrb[0].mxu0
  %v1433 = vadd.f32 0.0, %v1432
  %v1434 = vpop.f32.mrb[0].mxu0
  %1435 = vmatprep.mubr.f32.mxu0 0.0
  %1436 = vmatmul.mubr.f32.gmra.mrb[0].mxu0 %v1323
  %v1437 = vpop.f32.mrb[0].mxu0
  %v1438 = vadd.f32 0.0, %v1437
  %v1439 = vpop.f32.mrb[0].mxu0
  %1440 = vmatprep.mubr.f32.mxu0 0.0
  %1441 = vmatmul.mubr.f32.gmra.mrb[0].mxu0 %v1324
  %v1442 = vpop.f32.mrb[0].mxu0
  %v1443 = vadd.f32 0.0, %v1442
  %v1444 = vpop.f32.mrb[0].mxu0
  %1445 = vmatprep.mubr.f32.mxu0 0.0
  %1446 = vmatmul.mubr.f32.gmra.mrb[0].mxu0 %v1325
  %v1447 = vpop.f32.mrb[0].mxu0
  %v1448 = vadd.f32 0.0, %v1447
  %v1449 = vpop.f32.mrb[0].mxu0
  %1450 = vmatprep.mubr.f32.mxu0 0.0
  %1451 = vmatmul.mubr.f32.gmra.mrb[0].mxu0 %v1326
  %v1452 = vpop.f32.mrb[0].mxu0
  %v1453 = vadd.f32 0.0, %v1452
  %v1454 = vpop.f32.mrb[0].mxu0
  %1455 = vmatprep.mubr.f32.mxu0 0.0
  %1456 = vmatmul.mubr.f32.gmra.mrb[0].mxu0 %v1327
  %v1457 = vpop.f32.mrb[0].mxu0
  %v1458 = vadd.f32 0.0, %v1457
  %v1459 = vpop.f32.mrb[0].mxu0
  %1460 = vmatprep.mubr.f32.mxu0 0.0
  %1461 = vmatmul.mubr.f32.gmra.mrb[0].mxu0 %v1328
  %v1462 = vpop.f32.mrb[0].mxu0
  %v1463 = vadd.f32 0.0, %v1462
  %v1464 = vpop.f32.mrb[0].mxu0
  %1465 = vdwg.mxu0
  %v1466 = vrcp.pop %v1347
  %v1467 = vmul.f32 %v1423, %v1466
  %v1468 = vrcp.pop %v1348
  %v1469 = vmul.f32 %v1428, %v1468
  %v1470 = vrcp.pop %v1349
  %v1471 = vmul.f32 %v1433, %v1470
  %v1472 = vrcp.pop %v1350
  %v1473 = vmul.f32 %v1438, %v1472
  %v1474 = vrcp.pop %v1351
  %v1475 = vmul.f32 %v1443, %v1474
  %v1476 = vrcp.pop %v1352
  %v1477 = vmul.f32 %v1448, %v1476
  %v1478 = vrcp.pop %v1353
  %v1479 = vmul.f32 %v1453, %v1478
  %v1480 = vrcp.pop %v1354
  %v1481 = vmul.f32 %v1458, %v1480
  %v1482 = vrcp.pop %v1355
  %v1483 = vmul.f32 %v1463, %v1482
  %1487 = vrot.lane.b32.xlu0 %v1479, 64
  %v1488 = vpop.permute.xlu0 %1487
  %1489 = vrot.lane.b32.xlu0 %v1481, 64
  %v1490 = vpop.permute.xlu0 %1489
  %1491 = vrot.lane.b32.xlu0 %v1483, 64
  %v1492 = vpop.permute.xlu0 %1491
  %v1496 = vsel %vm141, %v1467, %v1488
  %v1497 = vsel %vm141, %v1469, %v1490
  %v1498 = vsel %vm141, %v1471, %v1492
  %v1499 = vld [vmem:[%s3] sm:$0xff]
  %v1500 = vld [vmem:[%s3 + $0x8] sm:$0xff]
  %v1501 = vld [vmem:[%s3 + $0x10] sm:$0xff]
  %v1502 = vld [vmem:[%s3 + $0x18] sm:$0xff]
  %v1503 = vld [vmem:[%s3 + $0x20] sm:$0xff]
  %v1504 = vld [vmem:[%s3 + $0x28] sm:$0xff]
  %v1505 = vld [vmem:[%s3 + $0x30] sm:$0xff]
  %v1506 = vld [vmem:[%s3 + $0x38] sm:$0xff]
  %v1507 = vld [vmem:[%s4] sm:$0xff]
  %v1508 = vld [vmem:[%s4 + $0x8] sm:$0xff]
  %v1509 = vld [vmem:[%s4 + $0x10] sm:$0xff]
  %v1510 = vld [vmem:[%s4 + $0x18] sm:$0xff]
  %v1511 = vld [vmem:[%s4 + $0x20] sm:$0xff]
  %v1512 = vld [vmem:[%s4 + $0x28] sm:$0xff]
  %v1513 = vld [vmem:[%s4 + $0x30] sm:$0xff]
  %v1514 = vld [vmem:[%s4 + $0x38] sm:$0xff]
  %1523 = vrot.lane.b32.xlu0 %v1507, 64
  %v1524 = vpop.permute.xlu0 %1523
  %1525 = vrot.lane.b32.xlu0 %v1508, 64
  %v1526 = vpop.permute.xlu0 %1525
  %1527 = vrot.lane.b32.xlu0 %v1509, 64
  %v1528 = vpop.permute.xlu0 %1527
  %1529 = vrot.lane.b32.xlu0 %v1510, 64
  %v1530 = vpop.permute.xlu0 %1529
  %1531 = vrot.lane.b32.xlu0 %v1511, 64
  %v1532 = vpop.permute.xlu0 %1531
  %1533 = vrot.lane.b32.xlu0 %v1512, 64
  %v1534 = vpop.permute.xlu0 %1533
  %1535 = vrot.lane.b32.xlu0 %v1513, 64
  %v1536 = vpop.permute.xlu0 %1535
  %1537 = vrot.lane.b32.xlu0 %v1514, 64
  %v1538 = vpop.permute.xlu0 %1537
  %v1547 = vsel %vm141, %v1499, %v1524
  %v1548 = vsel %vm141, %v1500, %v1526
  %v1549 = vsel %vm141, %v1501, %v1528
  %v1550 = vsel %vm141, %v1502, %v1530
  %v1551 = vsel %vm141, %v1503, %v1532
  %v1552 = vsel %vm141, %v1504, %v1534
  %v1553 = vsel %vm141, %v1505, %v1536
  %v1554 = vsel %vm141, %v1506, %v1538
  %1555 = vmatprep.subr.mxu0 0.0
  %1556 = vmatpush1.xpose.msra.mxu0 %v1547
  %1557 = vmatprep.subr.mxu0 0.0
  %1558 = vmatpush1.xpose.msra.mxu0 %v1548
  %1559 = vmatprep.subr.mxu0 0.0
  %1560 = vmatpush1.xpose.msra.mxu0 %v1549
  %1561 = vmatprep.subr.mxu0 0.0
  %1562 = vmatpush1.xpose.msra.mxu0 %v1550
  %1563 = vmatprep.subr.mxu0 0.0
  %1564 = vmatpush1.xpose.msra.mxu0 %v1551
  %1565 = vmatprep.subr.mxu0 0.0
  %1566 = vmatpush1.xpose.msra.mxu0 %v1552
  %1567 = vmatprep.subr.mxu0 0.0
  %1568 = vmatpush1.xpose.msra.mxu0 %v1553
  %1569 = vmatprep.subr.mxu0 0.0
  %1570 = vmatpush1.xpose.msra.mxu0 %v1554
  %1571 = vmatprep.subr.mxu0 0.0
  %1572 = vmatpush1.xpose.msra.mxu0 0.0
  %1573 = vmatprep.subr.mxu0 0.0
  %1574 = vmatpush1.xpose.msra.mxu0 0.0
  %1575 = vmatprep.subr.mxu0 0.0
  %1576 = vmatpush1.xpose.msra.mxu0 0.0
  %1577 = vmatprep.subr.mxu0 0.0
  %1578 = vmatpush1.xpose.msra.mxu0 0.0
  %1579 = vmatprep.subr.mxu0 0.0
  %1580 = vmatpush1.xpose.msra.mxu0 0.0
  %1581 = vmatprep.subr.mxu0 0.0
  %1582 = vmatpush1.xpose.msra.mxu0 0.0
  %1583 = vmatprep.subr.mxu0 0.0
  %1584 = vmatpush1.xpose.msra.mxu0 0.0
  %1585 = vmatprep.subr.mxu0 0.0
  %1586 = vmatpush1.xpose.msra.mxu0 0.0
  %1587 = vmatprep.subr.mxu0 0.0
  %1588 = vmatpush1.xpose.msra.mxu0 0.0
  %1589 = vmatprep.subr.mxu0 0.0
  %1590 = vmatpush1.xpose.msra.mxu0 0.0
  %1591 = vmatprep.subr.mxu0 0.0
  %1592 = vmatpush1.xpose.msra.mxu0 0.0
  %1593 = vmatprep.subr.mxu0 0.0
  %1594 = vmatpush1.xpose.msra.mxu0 0.0
  %1595 = vmatprep.subr.mxu0 0.0
  %1596 = vmatpush1.xpose.msra.mxu0 0.0
  %1597 = vmatprep.subr.mxu0 0.0
  %1598 = vmatpush1.xpose.msra.mxu0 0.0
  %1599 = vmatprep.subr.mxu0 0.0
  %1600 = vmatpush1.xpose.msra.mxu0 0.0
  %1601 = vmatprep.subr.mxu0 0.0
  %1602 = vmatpush1.xpose.msra.mxu0 0.0
  %1603 = vmatprep.subr.mxu0 0.0
  %1604 = vmatpush1.xpose.msra.mxu0 0.0
  %1605 = vmatprep.subr.mxu0 0.0
  %1606 = vmatpush1.xpose.msra.mxu0 0.0
  %1607 = vmatprep.subr.mxu0 0.0
  %1608 = vmatpush1.xpose.msra.mxu0 0.0
  %1609 = vmatprep.subr.mxu0 0.0
  %1610 = vmatpush1.xpose.msra.mxu0 0.0
  %1611 = vmatprep.subr.mxu0 0.0
  %1612 = vmatpush1.xpose.msra.mxu0 0.0
  %1613 = vmatprep.subr.mxu0 0.0
  %1614 = vmatpush1.xpose.msra.mxu0 0.0
  %1615 = vmatprep.subr.mxu0 0.0
  %1616 = vmatpush1.xpose.msra.mxu0 0.0
  %1617 = vmatprep.subr.mxu0 0.0
  %1618 = vmatpush1.xpose.msra.mxu0 0.0
  %1619 = vmatprep.mubr.f32.mxu0 0.0
  %1620 = vmatmul.mubr.f32.gmra.mrb[0].mxu0 %v1496
  %v1621 = vpop.f32.mrb[0].mxu0
  %v1622 = vadd.f32 0.0, %v1621
  %v1623 = vpop.f32.mrb[0].mxu0
  %1624 = vmatprep.mubr.f32.mxu0 0.0
  %1625 = vmatmul.mubr.f32.gmra.mrb[0].mxu0 %v1497
  %v1626 = vpop.f32.mrb[0].mxu0
  %v1627 = vadd.f32 0.0, %v1626
  %v1628 = vpop.f32.mrb[0].mxu0
  %1629 = vmatprep.mubr.f32.mxu0 0.0
  %1630 = vmatmul.mubr.f32.gmra.mrb[0].mxu0 %v1498
  %v1631 = vpop.f32.mrb[0].mxu0
  %v1632 = vadd.f32 0.0, %v1631
  %v1633 = vpop.f32.mrb[0].mxu0
  %1634 = vdwg.mxu0
  %v1635 = vxor.u32 %v1622, 2147483648
  %v1636 = vxor.u32 %v1627, 2147483648
  %v1637 = vxor.u32 %v1632, 2147483648
  %v1638 = vmul.f32 %v1635, 1.442695
  %v1639 = vpow.pop %v1638
  %v1640 = vmul.f32 %v1636, 1.442695
  %v1641 = vpow.pop %v1640
  %v1642 = vmul.f32 %v1637, 1.442695
  %v1643 = vpow.pop %v1642
  %v1644 = vadd.f32 %v1639, 1.0
  %v1645 = vadd.f32 %v1641, 1.0
  %v1646 = vadd.f32 %v1643, 1.0
  %v1647 = vrcp.pop %v1644
  %v1648 = vmul.f32 1.0, %v1647
  %v1649 = vrcp.pop %v1645
  %v1650 = vmul.f32 1.0, %v1649
  %v1651 = vrcp.pop %v1646
  %v1652 = vmul.f32 1.0, %v1651
  %v1653 = vmul.f32 %v1648, %v1467
  %v1654 = vmul.f32 %v1650, %v1469
  %v1655 = vmul.f32 %v1652, %v1471
  %v1656 = vsub.f32 1.0, %v1648
  %v1657 = vsub.f32 1.0, %v1650
  %v1658 = vsub.f32 1.0, %v1652
  %v1659 = vmul.f32 %v1656, %v1479
  %v1660 = vmul.f32 %v1657, %v1481
  %v1661 = vmul.f32 %v1658, %v1483
  %v1662 = vadd.f32 %v1653, %v1659
  %v1663 = vadd.f32 %v1654, %v1660
  %v1664 = vadd.f32 %v1655, %v1661
  %v1665 = vld [vmem:[%s8] sm:$0xff]
  %v1666 = vld [vmem:[%s8 + $0x8] sm:$0xff]
  %v1667 = vld [vmem:[%s8 + $0x10] sm:$0xff]
  %v1668 = vld [vmem:[%s8 + $0x18] sm:$0xff]
  %v1669 = vld [vmem:[%s8 + $0x20] sm:$0xff]
  %v1670 = vld [vmem:[%s8 + $0x28] sm:$0xff]
  %v1671 = vld [vmem:[%s8 + $0x30] sm:$0xff]
  %v1672 = vld [vmem:[%s8 + $0x38] sm:$0xff]
  %1673 = vset.pattern.permute.xlu0 0
  %1674 = vperm.xlu0 %1673, %v1665
  %v1675 = vpop.permute.xlu0 %1674
  %1676 = vset.pattern.permute.xlu0 0
  %1677 = vperm.xlu0 %1676, %v1666
  %v1678 = vpop.permute.xlu0 %1677
  %1679 = vset.pattern.permute.xlu0 0
  %1680 = vperm.xlu0 %1679, %v1667
  %v1681 = vpop.permute.xlu0 %1680
  %1682 = vset.pattern.permute.xlu0 0
  %1683 = vperm.xlu0 %1682, %v1668
  %v1684 = vpop.permute.xlu0 %1683
  %1685 = vset.pattern.permute.xlu0 0
  %1686 = vperm.xlu0 %1685, %v1669
  %v1687 = vpop.permute.xlu0 %1686
  %1688 = vset.pattern.permute.xlu0 0
  %1689 = vperm.xlu0 %1688, %v1670
  %v1690 = vpop.permute.xlu0 %1689
  %1691 = vset.pattern.permute.xlu0 0
  %1692 = vperm.xlu0 %1691, %v1671
  %v1693 = vpop.permute.xlu0 %1692
  %1694 = vset.pattern.permute.xlu0 0
  %1695 = vperm.xlu0 %1694, %v1672
  %v1696 = vpop.permute.xlu0 %1695
  %vm1697 = vcmp.eq.s32.totalorder %v1675, %v60
  %vm1698 = vcmp.eq.s32.totalorder %v1678, %v60
  %vm1699 = vcmp.eq.s32.totalorder %v1681, %v60
  %vm1700 = vcmp.eq.s32.totalorder %v1684, %v60
  %vm1701 = vcmp.eq.s32.totalorder %v1687, %v60
  %vm1702 = vcmp.eq.s32.totalorder %v1690, %v60
  %vm1703 = vcmp.eq.s32.totalorder %v1693, %v60
  %vm1704 = vcmp.eq.s32.totalorder %v1696, %v60
  %v1705 = vsel %vm1697, 1.0, 0.0
  %v1706 = vsel %vm1698, 1.0, 0.0
  %v1707 = vsel %vm1699, 1.0, 0.0
  %v1708 = vsel %vm1700, 1.0, 0.0
  %v1709 = vsel %vm1701, 1.0, 0.0
  %v1710 = vsel %vm1702, 1.0, 0.0
  %v1711 = vsel %vm1703, 1.0, 0.0
  %v1712 = vsel %vm1704, 1.0, 0.0
  %v1713 = vld [vmem:[%s9] sm:$0x1]
  %v1714 = vlaneseq
  %v1715 = vshrl.u32 %v1714, 7
  %v1716 = vsub.s32 0, %v1715
  %v1717 = vrot.slane %v1713, %v1716
  %vm1718 = vcmp.eq.s32.totalorder %v1717, %v1298
  %vm1719 = vcmp.eq.s32.totalorder %v1717, %v1299
  %v1720 = vsel %vm1718, 1.0, 0.0
  %v1721 = vsel %vm1719, 1.0, 0.0
  %v1723 = vsel %vm141, %v1720, 0
  %v1726 = vsel %vm141, %v1721, 0
  %1728 = vmatprep.subr.mxu0 0.0
  %1729 = vmatpush1.msra.mxu0 %v1705
  %1730 = vmatprep.subr.mxu0 0.0
  %1731 = vmatpush1.msra.mxu0 %v1706
  %1732 = vmatprep.subr.mxu0 0.0
  %1733 = vmatpush1.msra.mxu0 %v1707
  %1734 = vmatprep.subr.mxu0 0.0
  %1735 = vmatpush1.msra.mxu0 %v1708
  %1736 = vmatprep.subr.mxu0 0.0
  %1737 = vmatpush1.msra.mxu0 %v1709
  %1738 = vmatprep.subr.mxu0 0.0
  %1739 = vmatpush1.msra.mxu0 %v1710
  %1740 = vmatprep.subr.mxu0 0.0
  %1741 = vmatpush1.msra.mxu0 %v1711
  %1742 = vmatprep.subr.mxu0 0.0
  %1743 = vmatpush1.msra.mxu0 %v1712
  %1744 = vmatprep.subr.mxu0 0.0
  %1745 = vmatpush1.msra.mxu0 0.0
  %1746 = vmatprep.subr.mxu0 0.0
  %1747 = vmatpush1.msra.mxu0 0.0
  %1748 = vmatprep.subr.mxu0 0.0
  %1749 = vmatpush1.msra.mxu0 0.0
  %1750 = vmatprep.subr.mxu0 0.0
  %1751 = vmatpush1.msra.mxu0 0.0
  %1752 = vmatprep.subr.mxu0 0.0
  %1753 = vmatpush1.msra.mxu0 0.0
  %1754 = vmatprep.subr.mxu0 0.0
  %1755 = vmatpush1.msra.mxu0 0.0
  %1756 = vmatprep.subr.mxu0 0.0
  %1757 = vmatpush1.msra.mxu0 0.0
  %1758 = vmatprep.subr.mxu0 0.0
  %1759 = vmatpush1.msra.mxu0 0.0
  %1760 = vmatprep.subr.mxu0 0.0
  %1761 = vmatpush1.msra.mxu0 0.0
  %1762 = vmatprep.subr.mxu0 0.0
  %1763 = vmatpush1.msra.mxu0 0.0
  %1764 = vmatprep.subr.mxu0 0.0
  %1765 = vmatpush1.msra.mxu0 0.0
  %1766 = vmatprep.subr.mxu0 0.0
  %1767 = vmatpush1.msra.mxu0 0.0
  %1768 = vmatprep.subr.mxu0 0.0
  %1769 = vmatpush1.msra.mxu0 0.0
  %1770 = vmatprep.subr.mxu0 0.0
  %1771 = vmatpush1.msra.mxu0 0.0
  %1772 = vmatprep.subr.mxu0 0.0
  %1773 = vmatpush1.msra.mxu0 0.0
  %1774 = vmatprep.subr.mxu0 0.0
  %1775 = vmatpush1.msra.mxu0 0.0
  %1776 = vmatprep.subr.mxu0 0.0
  %1777 = vmatpush1.msra.mxu0 0.0
  %1778 = vmatprep.subr.mxu0 0.0
  %1779 = vmatpush1.msra.mxu0 0.0
  %1780 = vmatprep.subr.mxu0 0.0
  %1781 = vmatpush1.msra.mxu0 0.0
  %1782 = vmatprep.subr.mxu0 0.0
  %1783 = vmatpush1.msra.mxu0 0.0
  %1784 = vmatprep.subr.mxu0 0.0
  %1785 = vmatpush1.msra.mxu0 0.0
  %1786 = vmatprep.subr.mxu0 0.0
  %1787 = vmatpush1.msra.mxu0 0.0
  %1788 = vmatprep.subr.mxu0 0.0
  %1789 = vmatpush1.msra.mxu0 0.0
  %1790 = vmatprep.subr.mxu0 0.0
  %1791 = vmatpush1.msra.mxu0 0.0
  %1792 = vmatprep.mubr.f32.mxu0 0.0
  %1793 = vmatmul.mubr.f32.gmra.mrb[0].mxu0 %v1723
  %v1794 = vpop.f32.mrb[0].mxu0
  %v1795 = vadd.f32 0.0, %v1794
  %v1796 = vpop.f32.mrb[0].mxu0
  %1797 = vmatprep.mubr.f32.mxu0 0.0
  %1798 = vmatmul.mubr.f32.gmra.mrb[0].mxu0 %v1726
  %v1799 = vpop.f32.mrb[0].mxu0
  %v1800 = vadd.f32 0.0, %v1799
  %v1801 = vpop.f32.mrb[0].mxu0
  %1802 = vdwg.mxu0
  %vm1803 = vcmask 195584
  %v1805 = vsel %vm1803, %v1795, 0
  %v1808 = vsel %vm1803, %v1800, 0
  %1810 = vmatprep.subr.mxu0 0.0
  %1811 = vmatpush1.msra.mxu0 %v1662
  %1812 = vmatprep.subr.mxu0 0.0
  %1813 = vmatpush1.msra.mxu0 %v1663
  %1814 = vmatprep.subr.mxu0 0.0
  %1815 = vmatpush1.msra.mxu0 %v1664
  %1816 = vmatprep.subr.mxu0 0.0
  %1817 = vmatpush1.msra.mxu0 0.0
  %1818 = vmatprep.subr.mxu0 0.0
  %1819 = vmatpush1.msra.mxu0 0.0
  %1820 = vmatprep.subr.mxu0 0.0
  %1821 = vmatpush1.msra.mxu0 0.0
  %1822 = vmatprep.subr.mxu0 0.0
  %1823 = vmatpush1.msra.mxu0 0.0
  %1824 = vmatprep.subr.mxu0 0.0
  %1825 = vmatpush1.msra.mxu0 0.0
  %1826 = vmatprep.subr.mxu0 0.0
  %1827 = vmatpush1.msra.mxu0 0.0
  %1828 = vmatprep.subr.mxu0 0.0
  %1829 = vmatpush1.msra.mxu0 0.0
  %1830 = vmatprep.subr.mxu0 0.0
  %1831 = vmatpush1.msra.mxu0 0.0
  %1832 = vmatprep.subr.mxu0 0.0
  %1833 = vmatpush1.msra.mxu0 0.0
  %1834 = vmatprep.subr.mxu0 0.0
  %1835 = vmatpush1.msra.mxu0 0.0
  %1836 = vmatprep.subr.mxu0 0.0
  %1837 = vmatpush1.msra.mxu0 0.0
  %1838 = vmatprep.subr.mxu0 0.0
  %1839 = vmatpush1.msra.mxu0 0.0
  %1840 = vmatprep.subr.mxu0 0.0
  %1841 = vmatpush1.msra.mxu0 0.0
  %1842 = vmatprep.subr.mxu0 0.0
  %1843 = vmatpush1.msra.mxu0 0.0
  %1844 = vmatprep.subr.mxu0 0.0
  %1845 = vmatpush1.msra.mxu0 0.0
  %1846 = vmatprep.subr.mxu0 0.0
  %1847 = vmatpush1.msra.mxu0 0.0
  %1848 = vmatprep.subr.mxu0 0.0
  %1849 = vmatpush1.msra.mxu0 0.0
  %1850 = vmatprep.subr.mxu0 0.0
  %1851 = vmatpush1.msra.mxu0 0.0
  %1852 = vmatprep.subr.mxu0 0.0
  %1853 = vmatpush1.msra.mxu0 0.0
  %1854 = vmatprep.subr.mxu0 0.0
  %1855 = vmatpush1.msra.mxu0 0.0
  %1856 = vmatprep.subr.mxu0 0.0
  %1857 = vmatpush1.msra.mxu0 0.0
  %1858 = vmatprep.subr.mxu0 0.0
  %1859 = vmatpush1.msra.mxu0 0.0
  %1860 = vmatprep.subr.mxu0 0.0
  %1861 = vmatpush1.msra.mxu0 0.0
  %1862 = vmatprep.subr.mxu0 0.0
  %1863 = vmatpush1.msra.mxu0 0.0
  %1864 = vmatprep.subr.mxu0 0.0
  %1865 = vmatpush1.msra.mxu0 0.0
  %1866 = vmatprep.subr.mxu0 0.0
  %1867 = vmatpush1.msra.mxu0 0.0
  %1868 = vmatprep.subr.mxu0 0.0
  %1869 = vmatpush1.msra.mxu0 0.0
  %1870 = vmatprep.subr.mxu0 0.0
  %1871 = vmatpush1.msra.mxu0 0.0
  %1872 = vmatprep.subr.mxu0 0.0
  %1873 = vmatpush1.msra.mxu0 0.0
  %1874 = vmatprep.mubr.f32.mxu0 0.0
  %1875 = vmatmul.mubr.f32.gmra.mrb[0].mxu0 %v1805
  %v1876 = vpop.f32.mrb[0].mxu0
  %v1877 = vadd.f32 0.0, %v1876
  %v1878 = vpop.f32.mrb[0].mxu0
  %1879 = vmatprep.mubr.f32.mxu0 0.0
  %1880 = vmatmul.mubr.f32.gmra.mrb[0].mxu0 %v1808
  %v1881 = vpop.f32.mrb[0].mxu0
  %v1882 = vadd.f32 0.0, %v1881
  %v1883 = vpop.f32.mrb[0].mxu0
  %1884 = vdwg.mxu0
  %1885 = vst.msk [vmem:[%s10] sm:$0xff] %vm141, %v1662
  %1886 = vst.msk [vmem:[%s10 + $0x8] sm:$0xff] %vm141, %v1663
  %1887 = vst.msk [vmem:[%s10 + $0x10] sm:$0xff] %vm141, %v1664
  %1888 = vst.msk [vmem:[%s10 + $0x18] sm:$0xff] %vm141, %v1473
  %1889 = vst.msk [vmem:[%s10 + $0x20] sm:$0xff] %vm141, %v1475
  %1890 = vst.msk [vmem:[%s10 + $0x28] sm:$0xff] %vm141, %v1477
  %1891 = vst.msk [vmem:[%s10 + $0x30] sm:$0xff] %vm141, %v1877
  %1892 = vst.msk [vmem:[%s10 + $0x38] sm:$0xff] %vm141, %v1882
  // Predicated region
  $region42: #{aggregator_forward.1} parent=0 // pred_check
    _
  $region43: #{aggregator_forward.1} parent=0 // pred_check_branch
    %1894 = sbr.rel (0) target = $region45
  $region44: #{aggregator_forward.1} parent=0 // pred_region
    _
  $region45: #{aggregator_forward.1} parent=0 // pred_fallthru
    _
  // Predicated region
  $region46: #{aggregator_forward.1} parent=0 // pred_check
    _
  $region47: #{aggregator_forward.1} parent=0 // pred_check_branch
    %1896 = sbr.rel (0) target = $region49
  $region48: #{aggregator_forward.1} parent=0 // pred_region
    _
  $region49: #{aggregator_forward.1} parent=0 // pred_fallthru
    _

</llo_original>
